<compile_context>
chip_gen: v6e
topology: v6e:2x2x1
jax: 0.10.0
libtpu: 0.0.40
codegen_flags: <defaults>
</compile_context>

<pallas_src>
import functools

import jax
import jax.numpy as jnp
from jax.experimental import pallas as pl
from jax.experimental.pallas import tpu as pltpu

LN_EPS = 1e-5       # torch.nn.LayerNorm default
H1 = 1024
H2 = 512
HEAD_WIDTH = 128    # fused V+A head, padded to a full lane width


def _layer_norm(x, gamma, beta):
    mean = jnp.mean(x, axis=-1, keepdims=True)
    centered = x - mean
    var = jnp.mean(centered * centered, axis=-1, keepdims=True)
    inv = jax.lax.rsqrt(var + LN_EPS)            # f32 on all chips (v5e has no bf16 EUP)
    return centered * inv * gamma + beta


def dueling_dqn_kernel(x_ref, w1_ref, ln1_ref, w2_ref, ln2_ref, wh_ref, bh_ref, out_ref):
    # x: [TB, D_in] f32; weights bf16 [in, out]; lnN packs rows [bias, gamma, beta].
    x = x_ref[...]
    ln1 = ln1_ref[...]
    ln2 = ln2_ref[...]

    # fc_1 -> ln_1 -> relu   (bf16 MXU inputs, f32 accumulation)
    h1 = jnp.dot(x.astype(jnp.bfloat16), w1_ref[...],
                 preferred_element_type=jnp.float32) + ln1[0:1, :]
    h1 = jnp.maximum(_layer_norm(h1, ln1[1:2, :], ln1[2:3, :]), 0.0)

    # fc_2 -> ln_2 -> relu
    h2 = jnp.dot(h1.astype(jnp.bfloat16), w2_ref[...],
                 preferred_element_type=jnp.float32) + ln2[0:1, :]
    h2 = jnp.maximum(_layer_norm(h2, ln2[1:2, :], ln2[2:3, :]), 0.0)

    # Fused V+A head: single lane-dense [TB, 128] matmul + unmasked store.
    out_ref[...] = jnp.dot(h2.astype(jnp.bfloat16), wh_ref[...],
                           preferred_element_type=jnp.float32) + bh_ref[...]


@functools.partial(jax.jit, static_argnames=("n_actions", "block_b"))
def dueling_dqn_forward(state, params, *, n_actions, block_b=8):
    """state: [B, D_in] float32.  Returns (V: [B, 1], A: [B, n_actions])."""
    B, d_in = state.shape
    assert B % block_b == 0, "batch must be a multiple of the batch tile"

    grid = (B // block_b,)

    flops = 2 * B * (d_in * H1 + H1 * H2 + H2 * HEAD_WIDTH)
    bytes_accessed = (
        state.size * 4
        + params["w1"].size * 2 + params["w2"].size * 2 + params["wh"].size * 2
        + params["ln1"].size * 4 + params["ln2"].size * 4 + params["bh"].size * 4
        + B * HEAD_WIDTH * 4
    )

    fused = pl.pallas_call(
        dueling_dqn_kernel,
        out_shape=jax.ShapeDtypeStruct((B, HEAD_WIDTH), jnp.float32),
        grid_spec=pltpu.PrefetchScalarGridSpec(
            num_scalar_prefetch=0,
            grid=grid,
            in_specs=[
                # Activations: tiled over the batch.
                pl.BlockSpec((block_b, d_in), lambda i: (i, 0)),
                # Weights / packed vector params: constant index_map -> DMA'd once,
                # VMEM-resident across all batch-grid steps.
                pl.BlockSpec((d_in, H1), lambda i: (0, 0)),
                pl.BlockSpec((3, H1), lambda i: (0, 0)),
                pl.BlockSpec((H1, H2), lambda i: (0, 0)),
                pl.BlockSpec((3, H2), lambda i: (0, 0)),
                pl.BlockSpec((H2, HEAD_WIDTH), lambda i: (0, 0)),
                pl.BlockSpec((1, HEAD_WIDTH), lambda i: (0, 0)),
            ],
            out_specs=pl.BlockSpec((block_b, HEAD_WIDTH), lambda i: (i, 0)),
        ),
        compiler_params=pltpu.CompilerParams(
            dimension_semantics=("parallel",),   # shards the batch across v7x's 2 TCs
        ),
        cost_estimate=pl.CostEstimate(
            flops=flops, transcendentals=2 * B, bytes_accessed=bytes_accessed),
    )(state, params["w1"], params["ln1"], params["w2"], params["ln2"],
      params["wh"], params["bh"])

    V = fused[:, 0:1]
    A = fused[:, 1:1 + n_actions]
    return V, A


def init_params(key, input_dims, n_actions):
    """Deterministic init mimicking torch.nn.Linear (uniform +/- 1/sqrt(fan_in))
    and torch.nn.LayerNorm (gamma=1, beta=0), stored in the fused/packed layout."""
    assert 1 + n_actions <= HEAD_WIDTH

    def linear(key, fan_in, fan_out):
        kw, kb = jax.random.split(key)
        bound = 1.0 / jnp.sqrt(jnp.float32(fan_in))
        w = jax.random.uniform(kw, (fan_in, fan_out), jnp.float32, -bound, bound)
        b = jax.random.uniform(kb, (fan_out,), jnp.float32, -bound, bound)
        return w, b

    k1, k2, kv, ka = jax.random.split(key, 4)
    w1, b1 = linear(k1, input_dims, H1)
    w2, b2 = linear(k2, H1, H2)
    wv, bv = linear(kv, H2, 1)
    wa, ba = linear(ka, H2, n_actions)

    # Fused, zero-padded head: col 0 = V, cols 1..n_actions = A, rest unused.
    wh = jnp.zeros((H2, HEAD_WIDTH), jnp.float32)
    wh = wh.at[:, 0:1].set(wv).at[:, 1:1 + n_actions].set(wa)
    bh = jnp.zeros((1, HEAD_WIDTH), jnp.float32)
    bh = bh.at[0, 0].set(bv[0]).at[0, 1:1 + n_actions].set(ba)

    # Pack (bias, gamma, beta) per Linear+LayerNorm pair into one [3, N] buffer.
    ln1 = jnp.stack([b1, jnp.ones((H1,), jnp.float32), jnp.zeros((H1,), jnp.float32)])
    ln2 = jnp.stack([b2, jnp.ones((H2,), jnp.float32), jnp.zeros((H2,), jnp.float32)])

    return {
        "w1": w1.astype(jnp.bfloat16),
        "ln1": ln1,
        "w2": w2.astype(jnp.bfloat16),
        "ln2": ln2,
        "wh": wh.astype(jnp.bfloat16),
        "bh": bh,
    }


def _reference_forward(state, p, n_actions):
    """Pure-JAX reference matching the kernel's numerics (bf16 matmul inputs,
    f32 accumulation / LayerNorm), for a correctness check."""
    def lin(x, w, b):
        return jnp.dot(x.astype(jnp.bfloat16), w,
                       preferred_element_type=jnp.float32) + b

    ln1, ln2 = p["ln1"], p["ln2"]
    h1 = jnp.maximum(_layer_norm(lin(state, p["w1"], ln1[0:1]), ln1[1:2], ln1[2:3]), 0.0)
    h2 = jnp.maximum(_layer_norm(lin(h1, p["w2"], ln2[0:1]), ln2[1:2], ln2[2:3]), 0.0)
    head = lin(h2, p["wh"], p["bh"])
    return head[:, 0:1], head[:, 1:1 + n_actions]


if __name__ == "__main__":
    key = jax.random.PRNGKey(0)
    k_params, k_state = jax.random.split(key)

    B = 16            # small demo batch; multiple of the 8-row batch tile
    INPUT_DIMS = 64   # Yahtzee-style flat observation
    N_ACTIONS = 32

    params = init_params(k_params, INPUT_DIMS, N_ACTIONS)
    state = jax.random.normal(k_state, (B, INPUT_DIMS), jnp.float32)

    V, A = dueling_dqn_forward(state, params, n_actions=N_ACTIONS, block_b=8)
    jax.block_until_ready((V, A))

    V_ref, A_ref = _reference_forward(state, params, N_ACTIONS)
    assert V.shape == (B, 1) and A.shape == (B, N_ACTIONS)
    assert jnp.allclose(V, V_ref, atol=1e-2, rtol=1e-2), float(jnp.max(jnp.abs(V - V_ref)))
    assert jnp.allclose(A, A_ref, atol=1e-2, rtol=1e-2), float(jnp.max(jnp.abs(A - A_ref)))

    # TODO(synk): optimizer / MSELoss / checkpoint I/O from the PyTorch module are
    # training-side concerns and intentionally not part of the forward kernel.

    print("KERNEL_OK")
</pallas_src>

<mosaic_0001>
module attributes {stable_mosaic.version = 11 : i64} {
  func.func @dueling_dqn_kernel(%arg0: i32, %arg1: memref<8x64xf32, #tpu.memory_space<vmem>>, %arg2: memref<64x1024xbf16, #tpu.memory_space<vmem>>, %arg3: memref<3x1024xf32, #tpu.memory_space<vmem>>, %arg4: memref<1024x512xbf16, #tpu.memory_space<vmem>>, %arg5: memref<3x512xf32, #tpu.memory_space<vmem>>, %arg6: memref<512x128xbf16, #tpu.memory_space<vmem>>, %arg7: memref<1x128xf32, #tpu.memory_space<vmem>>, %arg8: memref<8x128xf32, #tpu.memory_space<vmem>>) attributes {dimension_semantics = [#tpu.dimension_semantics<parallel>], iteration_bounds = array<i64: 2>, scalar_prefetch = 0 : i64, scratch_operands = 0 : i64, tpu.core_type = #tpu.core_type<tc>, window_params = [{transform_indices = @transform_0, window_bounds = array<i64: 8, 64>}, {pipeline_mode = #tpu.pipeline_mode<synchronous>, transform_indices = @transform_1, window_bounds = array<i64: 64, 1024>}, {pipeline_mode = #tpu.pipeline_mode<synchronous>, transform_indices = @transform_2, window_bounds = array<i64: 3, 1024>}, {pipeline_mode = #tpu.pipeline_mode<synchronous>, transform_indices = @transform_3, window_bounds = array<i64: 1024, 512>}, {pipeline_mode = #tpu.pipeline_mode<synchronous>, transform_indices = @transform_4, window_bounds = array<i64: 3, 512>}, {pipeline_mode = #tpu.pipeline_mode<synchronous>, transform_indices = @transform_5, window_bounds = array<i64: 512, 128>}, {pipeline_mode = #tpu.pipeline_mode<synchronous>, transform_indices = @transform_6, window_bounds = array<i64: 1, 128>}, {transform_indices = @transform_7, window_bounds = array<i64: 8, 128>}]} {
    %c0 = arith.constant 0 : index
    %c0_0 = arith.constant 0 : index
    %0 = vector.load %arg1[%c0, %c0_0] : memref<8x64xf32, #tpu.memory_space<vmem>>, vector<8x64xf32>
    %c0_1 = arith.constant 0 : index
    %c0_2 = arith.constant 0 : index
    %1 = vector.load %arg3[%c0_1, %c0_2] : memref<3x1024xf32, #tpu.memory_space<vmem>>, vector<3x1024xf32>
    %c0_3 = arith.constant 0 : index
    %c0_4 = arith.constant 0 : index
    %2 = vector.load %arg5[%c0_3, %c0_4] : memref<3x512xf32, #tpu.memory_space<vmem>>, vector<3x512xf32>
    %3 = arith.truncf %0 : vector<8x64xf32> to vector<8x64xbf16>
    %c0_5 = arith.constant 0 : index
    %c0_6 = arith.constant 0 : index
    %4 = vector.load %arg2[%c0_5, %c0_6] : memref<64x1024xbf16, #tpu.memory_space<vmem>>, vector<64x1024xbf16>
    %cst = arith.constant dense<0.000000e+00> : vector<8x1024xf32>
    %5 = tpu.matmul %3, %4, %cst {dimension_numbers = #tpu.dot_dimension_numbers<[1], [0], [0], [1], [0, 0, 1, 1], [], []>} : vector<8x64xbf16>, vector<64x1024xbf16>, vector<8x1024xf32> -> vector<8x1024xf32>
    %6 = vector.extract_strided_slice %1 {offsets = [0, 0], sizes = [1, 1024], strides = [1, 1]} : vector<3x1024xf32> to vector<1x1024xf32>
    %7 = vector.broadcast %6 : vector<1x1024xf32> to vector<8x1024xf32>
    %8 = arith.addf %5, %7 : vector<8x1024xf32>
    %9 = vector.extract_strided_slice %1 {offsets = [1, 0], sizes = [1, 1024], strides = [1, 1]} : vector<3x1024xf32> to vector<1x1024xf32>
    %10 = vector.extract_strided_slice %1 {offsets = [2, 0], sizes = [1, 1024], strides = [1, 1]} : vector<3x1024xf32> to vector<1x1024xf32>
    %cst_7 = arith.constant dense<0.000000e+00> : vector<8xf32>
    %11 = vector.multi_reduction <add>, %8, %cst_7 [1] : vector<8x1024xf32> to vector<8xf32>
    %12 = vector.shape_cast %11 : vector<8xf32> to vector<8x1xf32>
    %cst_8 = arith.constant 1.024000e+03 : f32
    %13 = vector.broadcast %cst_8 : f32 to vector<8x1xf32>
    %14 = arith.divf %12, %13 : vector<8x1xf32>
    %15 = vector.broadcast %14 : vector<8x1xf32> to vector<8x1024xf32>
    %16 = arith.subf %8, %15 : vector<8x1024xf32>
    %17 = arith.mulf %16, %16 : vector<8x1024xf32>
    %cst_9 = arith.constant dense<0.000000e+00> : vector<8xf32>
    %18 = vector.multi_reduction <add>, %17, %cst_9 [1] : vector<8x1024xf32> to vector<8xf32>
    %19 = vector.shape_cast %18 : vector<8xf32> to vector<8x1xf32>
    %cst_10 = arith.constant 1.024000e+03 : f32
    %20 = vector.broadcast %cst_10 : f32 to vector<8x1xf32>
    %21 = arith.divf %19, %20 : vector<8x1xf32>
    %cst_11 = arith.constant 9.99999974E-6 : f32
    %22 = vector.broadcast %cst_11 : f32 to vector<8x1xf32>
    %23 = arith.addf %21, %22 : vector<8x1xf32>
    %24 = math.rsqrt %23 : vector<8x1xf32>
    %25 = vector.broadcast %24 : vector<8x1xf32> to vector<8x1024xf32>
    %26 = arith.mulf %16, %25 : vector<8x1024xf32>
    %27 = vector.broadcast %9 : vector<1x1024xf32> to vector<8x1024xf32>
    %28 = arith.mulf %26, %27 : vector<8x1024xf32>
    %29 = vector.broadcast %10 : vector<1x1024xf32> to vector<8x1024xf32>
    %30 = arith.addf %28, %29 : vector<8x1024xf32>
    %cst_12 = arith.constant 0.000000e+00 : f32
    %31 = vector.broadcast %cst_12 : f32 to vector<8x1024xf32>
    %32 = arith.maximumf %30, %31 : vector<8x1024xf32>
    %33 = arith.truncf %32 : vector<8x1024xf32> to vector<8x1024xbf16>
    %c0_13 = arith.constant 0 : index
    %c0_14 = arith.constant 0 : index
    %34 = vector.load %arg4[%c0_13, %c0_14] : memref<1024x512xbf16, #tpu.memory_space<vmem>>, vector<1024x512xbf16>
    %cst_15 = arith.constant dense<0.000000e+00> : vector<8x512xf32>
    %35 = tpu.matmul %33, %34, %cst_15 {dimension_numbers = #tpu.dot_dimension_numbers<[1], [0], [0], [1], [0, 0, 1, 1], [], []>} : vector<8x1024xbf16>, vector<1024x512xbf16>, vector<8x512xf32> -> vector<8x512xf32>
    %36 = vector.extract_strided_slice %2 {offsets = [0, 0], sizes = [1, 512], strides = [1, 1]} : vector<3x512xf32> to vector<1x512xf32>
    %37 = vector.broadcast %36 : vector<1x512xf32> to vector<8x512xf32>
    %38 = arith.addf %35, %37 : vector<8x512xf32>
    %39 = vector.extract_strided_slice %2 {offsets = [1, 0], sizes = [1, 512], strides = [1, 1]} : vector<3x512xf32> to vector<1x512xf32>
    %40 = vector.extract_strided_slice %2 {offsets = [2, 0], sizes = [1, 512], strides = [1, 1]} : vector<3x512xf32> to vector<1x512xf32>
    %cst_16 = arith.constant dense<0.000000e+00> : vector<8xf32>
    %41 = vector.multi_reduction <add>, %38, %cst_16 [1] : vector<8x512xf32> to vector<8xf32>
    %42 = vector.shape_cast %41 : vector<8xf32> to vector<8x1xf32>
    %cst_17 = arith.constant 5.120000e+02 : f32
    %43 = vector.broadcast %cst_17 : f32 to vector<8x1xf32>
    %44 = arith.divf %42, %43 : vector<8x1xf32>
    %45 = vector.broadcast %44 : vector<8x1xf32> to vector<8x512xf32>
    %46 = arith.subf %38, %45 : vector<8x512xf32>
    %47 = arith.mulf %46, %46 : vector<8x512xf32>
    %cst_18 = arith.constant dense<0.000000e+00> : vector<8xf32>
    %48 = vector.multi_reduction <add>, %47, %cst_18 [1] : vector<8x512xf32> to vector<8xf32>
    %49 = vector.shape_cast %48 : vector<8xf32> to vector<8x1xf32>
    %cst_19 = arith.constant 5.120000e+02 : f32
    %50 = vector.broadcast %cst_19 : f32 to vector<8x1xf32>
    %51 = arith.divf %49, %50 : vector<8x1xf32>
    %cst_20 = arith.constant 9.99999974E-6 : f32
    %52 = vector.broadcast %cst_20 : f32 to vector<8x1xf32>
    %53 = arith.addf %51, %52 : vector<8x1xf32>
    %54 = math.rsqrt %53 : vector<8x1xf32>
    %55 = vector.broadcast %54 : vector<8x1xf32> to vector<8x512xf32>
    %56 = arith.mulf %46, %55 : vector<8x512xf32>
    %57 = vector.broadcast %39 : vector<1x512xf32> to vector<8x512xf32>
    %58 = arith.mulf %56, %57 : vector<8x512xf32>
    %59 = vector.broadcast %40 : vector<1x512xf32> to vector<8x512xf32>
    %60 = arith.addf %58, %59 : vector<8x512xf32>
    %cst_21 = arith.constant 0.000000e+00 : f32
    %61 = vector.broadcast %cst_21 : f32 to vector<8x512xf32>
    %62 = arith.maximumf %60, %61 : vector<8x512xf32>
    %63 = arith.truncf %62 : vector<8x512xf32> to vector<8x512xbf16>
    %c0_22 = arith.constant 0 : index
    %c0_23 = arith.constant 0 : index
    %64 = vector.load %arg6[%c0_22, %c0_23] : memref<512x128xbf16, #tpu.memory_space<vmem>>, vector<512x128xbf16>
    %cst_24 = arith.constant dense<0.000000e+00> : vector<8x128xf32>
    %65 = tpu.matmul %63, %64, %cst_24 {dimension_numbers = #tpu.dot_dimension_numbers<[1], [0], [0], [1], [0, 0, 1, 1], [], []>} : vector<8x512xbf16>, vector<512x128xbf16>, vector<8x128xf32> -> vector<8x128xf32>
    %c0_25 = arith.constant 0 : index
    %c0_26 = arith.constant 0 : index
    %66 = vector.load %arg7[%c0_25, %c0_26] : memref<1x128xf32, #tpu.memory_space<vmem>>, vector<1x128xf32>
    %67 = vector.broadcast %66 : vector<1x128xf32> to vector<8x128xf32>
    %68 = arith.addf %65, %67 : vector<8x128xf32>
    %c0_27 = arith.constant 0 : index
    %c0_28 = arith.constant 0 : index
    %69 = vector.load %arg8[%c0_27, %c0_28] : memref<8x128xf32, #tpu.memory_space<vmem>>, vector<8x128xf32>
    tpu.vector_store %arg8[%c0_27, %c0_28], %68 {strides = array<i32>} : memref<8x128xf32, #tpu.memory_space<vmem>>, vector<8x128xf32>,
    return
  }
  func.func @transform_0(%arg0: i32) -> (i32, i32) {
    %c0_i32 = arith.constant 0 : i32
    %c0_i32_0 = arith.constant 0 : i32
    return %arg0, %c0_i32 : i32, i32
  }
  func.func @transform_1(%arg0: i32) -> (i32, i32) {
    %c0_i32 = arith.constant 0 : i32
    %c0_i32_0 = arith.constant 0 : i32
    %c0_i32_1 = arith.constant 0 : i32
    return %c0_i32, %c0_i32_0 : i32, i32
  }
  func.func @transform_2(%arg0: i32) -> (i32, i32) {
    %c0_i32 = arith.constant 0 : i32
    %c0_i32_0 = arith.constant 0 : i32
    %c0_i32_1 = arith.constant 0 : i32
    return %c0_i32, %c0_i32_0 : i32, i32
  }
  func.func @transform_3(%arg0: i32) -> (i32, i32) {
    %c0_i32 = arith.constant 0 : i32
    %c0_i32_0 = arith.constant 0 : i32
    %c0_i32_1 = arith.constant 0 : i32
    return %c0_i32, %c0_i32_0 : i32, i32
  }
  func.func @transform_4(%arg0: i32) -> (i32, i32) {
    %c0_i32 = arith.constant 0 : i32
    %c0_i32_0 = arith.constant 0 : i32
    %c0_i32_1 = arith.constant 0 : i32
    return %c0_i32, %c0_i32_0 : i32, i32
  }
  func.func @transform_5(%arg0: i32) -> (i32, i32) {
    %c0_i32 = arith.constant 0 : i32
    %c0_i32_0 = arith.constant 0 : i32
    %c0_i32_1 = arith.constant 0 : i32
    return %c0_i32, %c0_i32_0 : i32, i32
  }
  func.func @transform_6(%arg0: i32) -> (i32, i32) {
    %c0_i32 = arith.constant 0 : i32
    %c0_i32_0 = arith.constant 0 : i32
    %c0_i32_1 = arith.constant 0 : i32
    return %c0_i32, %c0_i32_0 : i32, i32
  }
  func.func @transform_7(%arg0: i32) -> (i32, i32) {
    %c0_i32 = arith.constant 0 : i32
    %c0_i32_0 = arith.constant 0 : i32
    return %arg0, %c0_i32 : i32, i32
  }
}

</mosaic_0001>

<llo_original>
// kernel: dueling_dqn_forward.1
$region0: #{dueling_dqn_forward.1}
  #allocation0 [shape = 'u32[]', space=smem, size = 0x4, offset = 0x4, fixed_abs, tag = 'smem constant byte address 0x4 - core index']
  #allocation1 [shape = 'u32[144,128]{1,0:T(1,128)}', space=vmem, size = 0x12000, scoped, tag = 'internal scratch']
  %s0 = inlined_call_operand.hbm [shape: f32[16,64], index: 0, kind: input, shape index: {}]
  %s1 = inlined_call_operand.hbm [shape: bf16[64,1024], index: 1, kind: input, shape index: {}]
  %s2 = inlined_call_operand.hbm [shape: f32[3,1024], index: 2, kind: input, shape index: {}]
  %s3 = inlined_call_operand.hbm [shape: bf16[1024,512], index: 3, kind: input, shape index: {}]
  %s4 = inlined_call_operand.hbm [shape: f32[3,512], index: 4, kind: input, shape index: {}]
  %s5 = inlined_call_operand.hbm [shape: bf16[512,128], index: 5, kind: input, shape index: {}]
  %s6 = inlined_call_operand.vmem [shape: f32[1,128], index: 6, kind: input, shape index: {}]
  %s7 = inlined_call_operand.vmem [shape: f32[16,128], index: 7, kind: output, shape index: {}]
  %s8 = sld [smem:[#allocation0]]
  $region85: #{dueling_dqn_forward.1} parent=0
    _
  %s10 = ssub.s32 1, %s8
  %s11 = scalar_select 0, %s10, %s8
  $region1: #{dueling_dqn_forward.1} parent=0
    #allocation2 [shape = 'u8[8192]{0}', space=vmem, size = 0x2000, scoped, tag = 'input window, operand 0']
    #allocation3 [shape = 's32[2]{0}', space=sflag, size = 0x8, scoped, tag = 'scoped memory for dueling_dqn_forward.1']
    #allocation4 [shape = 'u8[131072]{0}', space=vmem, size = 0x20000, scoped, tag = 'input window, operand 1, single buffered']
    #allocation5 [shape = 's32[1]{0}', space=sflag, size = 0x4, scoped, tag = 'scoped memory for dueling_dqn_forward.1']
    #allocation6 [shape = 'u8[16384]{0}', space=vmem, size = 0x4000, scoped, tag = 'input window, operand 2, single buffered']
    #allocation7 [shape = 'u8[1048576]{0}', space=vmem, size = 0x100000, scoped, tag = 'input window, operand 3, single buffered']
    #allocation8 [shape = 's32[1]{0}', space=sflag, size = 0x4, scoped, tag = 'scoped memory for dueling_dqn_forward.1']
    #allocation9 [shape = 'u8[8192]{0}', space=vmem, size = 0x2000, scoped, tag = 'input window, operand 4, single buffered']
    #allocation10 [shape = 'u8[131072]{0}', space=vmem, size = 0x20000, scoped, tag = 'input window, operand 5, single buffered']
    #allocation11 [shape = 's32[1]{0}', space=sflag, size = 0x4, scoped, tag = 'scoped memory for dueling_dqn_forward.1']
    %12 = vsyncpa [#allocation3], 0
    %s13 = scalar_lea.sflag [#allocation3], 1
    %14 = vsyncpa %s13, 0
    %15 = vsyncpa [#allocation5], 0
    %16 = vsyncpa [#allocation8], 0
    %17 = vsyncpa [#allocation11], 0
    loop: start=0, step=1, limit=4
    $region2: #{dueling_dqn_forward.1} parent=1 // loop_pre_header
      _
    $region3: #{dueling_dqn_forward.1} parent=1 // loop_header
      %s19 = sphi 0, %s23
      %p20 = scmp.ge.s32.totalorder %s19, 4
      %s29 = sphi 0, %s31
      %s32 = sphi 0, %s29
      %s33 = sphi 0, %s32
      %s49 = sphi 0, %s33
      %s53 = sphi 0, %s53
      %s55 = sphi 0, %s53
      %s56 = sphi 0, %s55
      %s70 = sphi 0, %s56
      %s74 = sphi 0, %s74
      %s76 = sphi 0, %s74
      %s77 = sphi 0, %s76
      %s91 = sphi 0, %s77
      %s95 = sphi 0, %s95
      %s97 = sphi 0, %s95
      %s98 = sphi 0, %s97
      %s112 = sphi 0, %s98
      %s116 = sphi 0, %s116
      %s118 = sphi 0, %s116
      %s119 = sphi 0, %s118
      %s133 = sphi 0, %s119
      %s137 = sphi 0, %s137
      %s139 = sphi 0, %s137
      %s140 = sphi 0, %s139
      %s154 = sphi 0, %s140
      %s158 = sphi 0, %s158
      %s160 = sphi 0, %s158
      %s161 = sphi 0, %s160
      %s175 = sphi 0, %s161
      %s181 = sphi 0, %s183
      %s184 = sphi 0, %s181
      %s185 = sphi 0, %s184
      %s201 = sphi 0, %s185
    $region4: #{dueling_dqn_forward.1} parent=1 // loop_header_branch
      %22 = sbr.rel (%p20) target = $region8
    $region5: #{dueling_dqn_forward.1} parent=1 // loop_body
      %s24 = ssub.s32 %s19, 1
      %s25 = ssub.s32 %s19, 2
      %s26 = sadd.s32 %s19, 1
      %s27 = ssub.s32 %s19, %s26
      %p28 = scmp.eq.s32.totalorder %s27, 0
      %s30 = sadd.s32 %s29, 1
      %s31 = scalar_select %p28, %s29, %s30
      %p34 = pneg %p28
      %p35 = scmp.eq.s32.totalorder %s19, 1
      %p36 = por %p34, %p35
      %p37 = scmp.ne.s32.totalorder %s29, %s32
      %p38 = scmp.eq.s32.totalorder %s19, 0
      %p39 = por %p37, %p38
      %p40 = scmp.ne.s32.totalorder %s29, %s32
      %p41 = scmp.eq.s32.totalorder %s24, 1
      %p42 = por %p40, %p41
      %p43 = scmp.ne.s32.totalorder %s32, %s33
      %p44 = scmp.eq.s32.totalorder %s24, 0
      %p45 = por %p43, %p44
      %p46 = scmp.ne.s32.totalorder %s32, %s33
      %p47 = scmp.eq.s32.totalorder %s25, 1
      %p48 = por %p46, %p47
      %p50 = scmp.ne.s32.totalorder %s33, %s49
      %p51 = scmp.eq.s32.totalorder %s25, 0
      %p52 = por %p50, %p51
      %s54 = sadd.s32 %s53, 1
      %p57 = scmp.eq.s32.totalorder %s19, 1
      %p58 = scmp.ne.s32.totalorder %s53, %s55
      %p59 = scmp.eq.s32.totalorder %s19, 0
      %p60 = por %p58, %p59
      %p61 = scmp.ne.s32.totalorder %s53, %s55
      %p62 = scmp.eq.s32.totalorder %s24, 1
      %p63 = por %p61, %p62
      %p64 = scmp.ne.s32.totalorder %s55, %s56
      %p65 = scmp.eq.s32.totalorder %s24, 0
      %p66 = por %p64, %p65
      %p67 = scmp.ne.s32.totalorder %s55, %s56
      %p68 = scmp.eq.s32.totalorder %s25, 1
      %p69 = por %p67, %p68
      %p71 = scmp.ne.s32.totalorder %s56, %s70
      %p72 = scmp.eq.s32.totalorder %s25, 0
      %p73 = por %p71, %p72
      %s75 = sadd.s32 %s74, 1
      %p78 = scmp.eq.s32.totalorder %s19, 1
      %p79 = scmp.ne.s32.totalorder %s74, %s76
      %p80 = scmp.eq.s32.totalorder %s19, 0
      %p81 = por %p79, %p80
      %p82 = scmp.ne.s32.totalorder %s74, %s76
      %p83 = scmp.eq.s32.totalorder %s24, 1
      %p84 = por %p82, %p83
      %p85 = scmp.ne.s32.totalorder %s76, %s77
      %p86 = scmp.eq.s32.totalorder %s24, 0
      %p87 = por %p85, %p86
      %p88 = scmp.ne.s32.totalorder %s76, %s77
      %p89 = scmp.eq.s32.totalorder %s25, 1
      %p90 = por %p88, %p89
      %p92 = scmp.ne.s32.totalorder %s77, %s91
      %p93 = scmp.eq.s32.totalorder %s25, 0
      %p94 = por %p92, %p93
      %s96 = sadd.s32 %s95, 1
      %p99 = scmp.eq.s32.totalorder %s19, 1
      %p100 = scmp.ne.s32.totalorder %s95, %s97
      %p101 = scmp.eq.s32.totalorder %s19, 0
      %p102 = por %p100, %p101
      %p103 = scmp.ne.s32.totalorder %s95, %s97
      %p104 = scmp.eq.s32.totalorder %s24, 1
      %p105 = por %p103, %p104
      %p106 = scmp.ne.s32.totalorder %s97, %s98
      %p107 = scmp.eq.s32.totalorder %s24, 0
      %p108 = por %p106, %p107
      %p109 = scmp.ne.s32.totalorder %s97, %s98
      %p110 = scmp.eq.s32.totalorder %s25, 1
      %p111 = por %p109, %p110
      %p113 = scmp.ne.s32.totalorder %s98, %s112
      %p114 = scmp.eq.s32.totalorder %s25, 0
      %p115 = por %p113, %p114
      %s117 = sadd.s32 %s116, 1
      %p120 = scmp.eq.s32.totalorder %s19, 1
      %p121 = scmp.ne.s32.totalorder %s116, %s118
      %p122 = scmp.eq.s32.totalorder %s19, 0
      %p123 = por %p121, %p122
      %p124 = scmp.ne.s32.totalorder %s116, %s118
      %p125 = scmp.eq.s32.totalorder %s24, 1
      %p126 = por %p124, %p125
      %p127 = scmp.ne.s32.totalorder %s118, %s119
      %p128 = scmp.eq.s32.totalorder %s24, 0
      %p129 = por %p127, %p128
      %p130 = scmp.ne.s32.totalorder %s118, %s119
      %p131 = scmp.eq.s32.totalorder %s25, 1
      %p132 = por %p130, %p131
      %p134 = scmp.ne.s32.totalorder %s119, %s133
      %p135 = scmp.eq.s32.totalorder %s25, 0
      %p136 = por %p134, %p135
      %s138 = sadd.s32 %s137, 1
      %p141 = scmp.eq.s32.totalorder %s19, 1
      %p142 = scmp.ne.s32.totalorder %s137, %s139
      %p143 = scmp.eq.s32.totalorder %s19, 0
      %p144 = por %p142, %p143
      %p145 = scmp.ne.s32.totalorder %s137, %s139
      %p146 = scmp.eq.s32.totalorder %s24, 1
      %p147 = por %p145, %p146
      %p148 = scmp.ne.s32.totalorder %s139, %s140
      %p149 = scmp.eq.s32.totalorder %s24, 0
      %p150 = por %p148, %p149
      %p151 = scmp.ne.s32.totalorder %s139, %s140
      %p152 = scmp.eq.s32.totalorder %s25, 1
      %p153 = por %p151, %p152
      %p155 = scmp.ne.s32.totalorder %s140, %s154
      %p156 = scmp.eq.s32.totalorder %s25, 0
      %p157 = por %p155, %p156
      %s159 = sadd.s32 %s158, 1
      %p162 = scmp.eq.s32.totalorder %s19, 1
      %p163 = scmp.ne.s32.totalorder %s158, %s160
      %p164 = scmp.eq.s32.totalorder %s19, 0
      %p165 = por %p163, %p164
      %p166 = scmp.ne.s32.totalorder %s158, %s160
      %p167 = scmp.eq.s32.totalorder %s24, 1
      %p168 = por %p166, %p167
      %p169 = scmp.ne.s32.totalorder %s160, %s161
      %p170 = scmp.eq.s32.totalorder %s24, 0
      %p171 = por %p169, %p170
      %p172 = scmp.ne.s32.totalorder %s160, %s161
      %p173 = scmp.eq.s32.totalorder %s25, 1
      %p174 = por %p172, %p173
      %p176 = scmp.ne.s32.totalorder %s161, %s175
      %p177 = scmp.eq.s32.totalorder %s25, 0
      %p178 = por %p176, %p177
      %s179 = ssub.s32 %s19, %s26
      %p180 = scmp.eq.s32.totalorder %s179, 0
      %s182 = sadd.s32 %s181, 1
      %s183 = scalar_select %p180, %s181, %s182
      %p186 = pneg %p180
      %p187 = scmp.eq.s32.totalorder %s19, 1
      %p188 = por %p186, %p187
      %p189 = scmp.ne.s32.totalorder %s181, %s184
      %p190 = scmp.eq.s32.totalorder %s19, 0
      %p191 = por %p189, %p190
      %p192 = scmp.ne.s32.totalorder %s181, %s184
      %p193 = scmp.eq.s32.totalorder %s24, 1
      %p194 = por %p192, %p193
      %p195 = scmp.ne.s32.totalorder %s184, %s185
      %p196 = scmp.eq.s32.totalorder %s24, 0
      %p197 = por %p195, %p196
      %p198 = scmp.ne.s32.totalorder %s184, %s185
      %p199 = scmp.eq.s32.totalorder %s25, 1
      %p200 = por %p198, %p199
      %p202 = scmp.ne.s32.totalorder %s185, %s201
      %p203 = scmp.eq.s32.totalorder %s25, 0
      %p204 = por %p202, %p203
      %p205 = scmp.le.s32.totalorder 1, %s19
      %p206 = scmp.lt.s32.totalorder %s19, 3
      %p207 = pnand %p205, %p206
      %p208 = pneg %p207
      // Predicated region
      $region9: #{dueling_dqn_forward.1} parent=5 // pred_check
        _
      $region10: #{dueling_dqn_forward.1} parent=5 // pred_check_branch
        %210 = sbr.rel (%p207) target = $region12
      $region11: #{dueling_dqn_forward.1} parent=5 // pred_region
        %s211 = ssub.s32 %s19, 1
        // Predicated region
        $region13: #{dueling_dqn_forward.1} parent=11 // pred_check
          %p212 = pneg %p66
        $region14: #{dueling_dqn_forward.1} parent=11 // pred_check_branch
          %214 = sbr.rel (%p212) target = $region16
        $region15: #{dueling_dqn_forward.1} parent=11 // pred_region
          %s216 = ssub.s32 4096, 4096
          %217 = vsyncadd [#allocation5], %s216
          %s218 = sshll.u32 [#allocation4], 4
          %s219 = int_to_ptr.vmem [resolvable:$true] %s218
          %224 = dma.hbm_to_vmem [thread:$0]  %s1, 4096, %s219, [#allocation5], 512, 512, 32
        $region16: #{dueling_dqn_forward.1} parent=11 // pred_fallthru
          _
        // Predicated region
        $region17: #{dueling_dqn_forward.1} parent=11 // pred_check
          %p225 = pneg %p87
        $region18: #{dueling_dqn_forward.1} parent=11 // pred_check_branch
          %227 = sbr.rel (%p225) target = $region20
        $region19: #{dueling_dqn_forward.1} parent=11 // pred_region
          %s229 = ssub.s32 512, 512
          %230 = vsyncadd [#allocation5], %s229
          %s232 = sshll.u32 [#allocation6], 4
          %s233 = int_to_ptr.vmem [resolvable:$true] %s232
          %235 = dma.hbm_to_vmem [thread:$0]  %s2, 512, %s233, [#allocation5]
        $region20: #{dueling_dqn_forward.1} parent=11 // pred_fallthru
          _
        // Predicated region
        $region21: #{dueling_dqn_forward.1} parent=11 // pred_check
          %p236 = pneg %p108
        $region22: #{dueling_dqn_forward.1} parent=11 // pred_check_branch
          %238 = sbr.rel (%p236) target = $region24
        $region23: #{dueling_dqn_forward.1} parent=11 // pred_region
          %s240 = ssub.s32 32768, 32768
          %241 = vsyncadd [#allocation8], %s240
          %s242 = sshll.u32 [#allocation7], 4
          %s243 = int_to_ptr.vmem [resolvable:$true] %s242
          %248 = dma.hbm_to_vmem [thread:$0]  %s3, 32768, %s243, [#allocation8], 256, 256, 16
        $region24: #{dueling_dqn_forward.1} parent=11 // pred_fallthru
          _
        // Predicated region
        $region25: #{dueling_dqn_forward.1} parent=11 // pred_check
          %p249 = pneg %p129
        $region26: #{dueling_dqn_forward.1} parent=11 // pred_check_branch
          %251 = sbr.rel (%p249) target = $region28
        $region27: #{dueling_dqn_forward.1} parent=11 // pred_region
          %s253 = ssub.s32 256, 256
          %254 = vsyncadd [#allocation8], %s253
          %s256 = sshll.u32 [#allocation9], 4
          %s257 = int_to_ptr.vmem [resolvable:$true] %s256
          %259 = dma.hbm_to_vmem [thread:$0]  %s4, 256, %s257, [#allocation8]
        $region28: #{dueling_dqn_forward.1} parent=11 // pred_fallthru
          _
        // Predicated region
        $region29: #{dueling_dqn_forward.1} parent=11 // pred_check
          %p260 = pneg %p150
        $region30: #{dueling_dqn_forward.1} parent=11 // pred_check_branch
          %262 = sbr.rel (%p260) target = $region32
        $region31: #{dueling_dqn_forward.1} parent=11 // pred_region
          %s264 = ssub.s32 4096, 4096
          %265 = vsyncadd [#allocation11], %s264
          %s266 = sshll.u32 [#allocation10], 4
          %s267 = int_to_ptr.vmem [resolvable:$true] %s266
          %272 = dma.hbm_to_vmem [thread:$0]  %s5, 4096, %s267, [#allocation11], 64, 64, 4
        $region32: #{dueling_dqn_forward.1} parent=11 // pred_fallthru
          _
        // Predicated region
        $region33: #{dueling_dqn_forward.1} parent=11 // pred_check
          %p273 = pneg %p171
        $region34: #{dueling_dqn_forward.1} parent=11 // pred_check_branch
          %275 = sbr.rel (%p273) target = $region36
        $region35: #{dueling_dqn_forward.1} parent=11 // pred_region
          _
        $region36: #{dueling_dqn_forward.1} parent=11 // pred_fallthru
          _
      $region12: #{dueling_dqn_forward.1} parent=5 // pred_fallthru
        _
      %p276 = scmp.lt.s32.totalorder %s19, 2
      // Predicated region
      $region37: #{dueling_dqn_forward.1} parent=5 // pred_check
        %p277 = pneg %p276
      $region38: #{dueling_dqn_forward.1} parent=5 // pred_check_branch
        %279 = sbr.rel (%p277) target = $region40
      $region39: #{dueling_dqn_forward.1} parent=5 // pred_region
        // Predicated region
        $region41: #{dueling_dqn_forward.1} parent=39 // pred_check
          %p280 = pneg %p39
        $region42: #{dueling_dqn_forward.1} parent=39 // pred_check_branch
          %282 = sbr.rel (%p280) target = $region44
        $region43: #{dueling_dqn_forward.1} parent=39 // pred_region
          %s283 = sand.u32 %s29, 1
          %s284 = scalar_lea.sflag [#allocation3], %s283
          %s285 = sand.u32 %s29, 1
          %s286 = smul.addr %s285, 8
          %s287 = scalar_lea.vmem [#allocation2], %s286
          %s289 = ssub.s32 128, 128
          %290 = vsyncadd %s284, %s289
          %s291 = smul.addr %s19, 128
          %s292 = scalar_lea.hbm %s0, %s291
          %s294 = sshll.u32 %s287, 4
          %s295 = int_to_ptr.vmem [resolvable:$true] %s294
          %297 = dma.hbm_to_vmem [thread:$0]  %s292, 128, %s295, %s284
        $region44: #{dueling_dqn_forward.1} parent=39 // pred_fallthru
          _
      $region40: #{dueling_dqn_forward.1} parent=5 // pred_fallthru
        _
      %p298 = scmp.le.s32.totalorder 1, %s19
      %p299 = scmp.lt.s32.totalorder %s19, 3
      %p300 = pnand %p298, %p299
      %p301 = pneg %p300
      // Predicated region
      $region45: #{dueling_dqn_forward.1} parent=5 // pred_check
        _
      $region46: #{dueling_dqn_forward.1} parent=5 // pred_check_branch
        %303 = sbr.rel (%p300) target = $region48
      $region47: #{dueling_dqn_forward.1} parent=5 // pred_region
        %s304 = ssub.s32 %s19, 1
        %s305 = sand.u32 %s32, 1
        %s306 = scalar_lea.sflag [#allocation3], %s305
        %s307 = sand.u32 %s32, 1
        %s308 = smul.addr %s307, 8
        %s309 = scalar_lea.vmem [#allocation2], %s308
        // Predicated region
        $region49: #{dueling_dqn_forward.1} parent=47 // pred_check
          %p310 = pneg %p45
        $region50: #{dueling_dqn_forward.1} parent=47 // pred_check_branch
          %312 = sbr.rel (%p310) target = $region52
        $region51: #{dueling_dqn_forward.1} parent=47 // pred_region
          %313 = dma.done %s306, 128
        $region52: #{dueling_dqn_forward.1} parent=47 // pred_fallthru
          _
        // Predicated region
        $region53: #{dueling_dqn_forward.1} parent=47 // pred_check
          %p314 = pneg %p66
        $region54: #{dueling_dqn_forward.1} parent=47 // pred_check_branch
          %316 = sbr.rel (%p314) target = $region56
        $region55: #{dueling_dqn_forward.1} parent=47 // pred_region
          %317 = dma.done [#allocation5], 4096
        $region56: #{dueling_dqn_forward.1} parent=47 // pred_fallthru
          _
        // Predicated region
        $region57: #{dueling_dqn_forward.1} parent=47 // pred_check
          %p318 = pneg %p87
        $region58: #{dueling_dqn_forward.1} parent=47 // pred_check_branch
          %320 = sbr.rel (%p318) target = $region60
        $region59: #{dueling_dqn_forward.1} parent=47 // pred_region
          %321 = dma.done [#allocation5], 512
        $region60: #{dueling_dqn_forward.1} parent=47 // pred_fallthru
          _
        // Predicated region
        $region61: #{dueling_dqn_forward.1} parent=47 // pred_check
          %p322 = pneg %p108
        $region62: #{dueling_dqn_forward.1} parent=47 // pred_check_branch
          %324 = sbr.rel (%p322) target = $region64
        $region63: #{dueling_dqn_forward.1} parent=47 // pred_region
          %325 = dma.done [#allocation8], 32768
        $region64: #{dueling_dqn_forward.1} parent=47 // pred_fallthru
          _
        // Predicated region
        $region65: #{dueling_dqn_forward.1} parent=47 // pred_check
          %p326 = pneg %p129
        $region66: #{dueling_dqn_forward.1} parent=47 // pred_check_branch
          %328 = sbr.rel (%p326) target = $region68
        $region67: #{dueling_dqn_forward.1} parent=47 // pred_region
          %329 = dma.done [#allocation8], 256
        $region68: #{dueling_dqn_forward.1} parent=47 // pred_fallthru
          _
        // Predicated region
        $region69: #{dueling_dqn_forward.1} parent=47 // pred_check
          %p330 = pneg %p150
        $region70: #{dueling_dqn_forward.1} parent=47 // pred_check_branch
          %332 = sbr.rel (%p330) target = $region72
        $region71: #{dueling_dqn_forward.1} parent=47 // pred_region
          %333 = dma.done [#allocation11], 4096
        $region72: #{dueling_dqn_forward.1} parent=47 // pred_fallthru
          _
        %s334 = sand.u32 %s32, 1
        %s335 = scalar_lea.sflag [#allocation3], %s334
        %s336 = sand.u32 %s32, 1
        %s337 = smul.addr %s336, 8
        %s338 = scalar_lea.vmem [#allocation2], %s337
        %p339 = pneg %p45
        %p340 = pneg %p42
        %p341 = pneg %p66
        %p342 = pneg %p63
        %p343 = pneg %p87
        %p344 = pneg %p84
        %p345 = pneg %p108
        %p346 = pneg %p105
        %p347 = pneg %p129
        %p348 = pneg %p126
        %p349 = pneg %p150
        %p350 = pneg %p147
        %p351 = pneg %p171
        %p352 = pneg %p168
        %p353 = pneg %p197
        %p354 = pneg %p194
        %p355 = scmp.lt.s32.totalorder %s24, 1
        %s356 = scalar_select %p355, %s24, 1
        %s357 = smul.addr %s356, 8
        %s358 = scalar_lea.vmem %s7, %s357
        %p359 = scmp.lt.s32.totalorder %s24, 1
        %s360 = scalar_select %p359, %s24, 1
        %s361 = smul.addr %s360, 8
        %s362 = scalar_lea.vmem %s7, %s361
        %v364 = vld [vmem:[%s309] sm:$0xff]
        %v365 = vld [vmem:[#allocation6] sm:$0x77]
        %v366 = vld [vmem:[#allocation6 + $0x8] sm:$0x77]
        %v367 = vld [vmem:[#allocation6 + $0x10] sm:$0x77]
        %v368 = vld [vmem:[#allocation6 + $0x18] sm:$0x77]
        %v369 = vld [vmem:[#allocation9] sm:$0x77]
        %v370 = vld [vmem:[#allocation9 + $0x8] sm:$0x77]
        %v371 = vpack.c.bf16 %v364, %v364
        %v372 = vld [vmem:[#allocation4] sm:$0xff]
        %v373 = vld [vmem:[#allocation4 + $0x8] sm:$0xff]
        %v374 = vld [vmem:[#allocation4 + $0x10] sm:$0xff]
        %v375 = vld [vmem:[#allocation4 + $0x18] sm:$0xff]
        %v376 = vld [vmem:[#allocation4 + $0x20] sm:$0xff]
        %v377 = vld [vmem:[#allocation4 + $0x28] sm:$0xff]
        %v378 = vld [vmem:[#allocation4 + $0x30] sm:$0xff]
        %v379 = vld [vmem:[#allocation4 + $0x38] sm:$0xff]
        %v380 = vld [vmem:[#allocation4 + $0x40] sm:$0xff]
        %v381 = vld [vmem:[#allocation4 + $0x48] sm:$0xff]
        %v382 = vld [vmem:[#allocation4 + $0x50] sm:$0xff]
        %v383 = vld [vmem:[#allocation4 + $0x58] sm:$0xff]
        %v384 = vld [vmem:[#allocation4 + $0x60] sm:$0xff]
        %v385 = vld [vmem:[#allocation4 + $0x68] sm:$0xff]
        %v386 = vld [vmem:[#allocation4 + $0x70] sm:$0xff]
        %v387 = vld [vmem:[#allocation4 + $0x78] sm:$0xff]
        %v388 = vld [vmem:[#allocation4 + $0x80] sm:$0xff]
        %v389 = vld [vmem:[#allocation4 + $0x88] sm:$0xff]
        %v390 = vld [vmem:[#allocation4 + $0x90] sm:$0xff]
        %v391 = vld [vmem:[#allocation4 + $0x98] sm:$0xff]
        %v392 = vld [vmem:[#allocation4 + $0xa0] sm:$0xff]
        %v393 = vld [vmem:[#allocation4 + $0xa8] sm:$0xff]
        %v394 = vld [vmem:[#allocation4 + $0xb0] sm:$0xff]
        %v395 = vld [vmem:[#allocation4 + $0xb8] sm:$0xff]
        %v396 = vld [vmem:[#allocation4 + $0xc0] sm:$0xff]
        %v397 = vld [vmem:[#allocation4 + $0xc8] sm:$0xff]
        %v398 = vld [vmem:[#allocation4 + $0xd0] sm:$0xff]
        %v399 = vld [vmem:[#allocation4 + $0xd8] sm:$0xff]
        %v400 = vld [vmem:[#allocation4 + $0xe0] sm:$0xff]
        %v401 = vld [vmem:[#allocation4 + $0xe8] sm:$0xff]
        %v402 = vld [vmem:[#allocation4 + $0xf0] sm:$0xff]
        %v403 = vld [vmem:[#allocation4 + $0xf8] sm:$0xff]
        %v408 = vlaneseq
        %v409 = vshrl.u32 %v408, 7
        %v410 = vsub.s32 0, %v409
        %v411 = vrot.slane %v365, %v410
        %v412 = vlaneseq
        %v413 = vshrl.u32 %v412, 7
        %v414 = vsub.s32 4, %v413
        %v415 = vrot.slane %v365, %v414
        %v416 = vlaneseq
        %v417 = vshrl.u32 %v416, 7
        %v418 = vsub.s32 0, %v417
        %v419 = vrot.slane %v366, %v418
        %v420 = vlaneseq
        %v421 = vshrl.u32 %v420, 7
        %v422 = vsub.s32 4, %v421
        %v423 = vrot.slane %v366, %v422
        %v424 = vlaneseq
        %v425 = vshrl.u32 %v424, 7
        %v426 = vsub.s32 0, %v425
        %v427 = vrot.slane %v367, %v426
        %v428 = vlaneseq
        %v429 = vshrl.u32 %v428, 7
        %v430 = vsub.s32 4, %v429
        %v431 = vrot.slane %v367, %v430
        %v432 = vlaneseq
        %v433 = vshrl.u32 %v432, 7
        %v434 = vsub.s32 0, %v433
        %v435 = vrot.slane %v368, %v434
        %v436 = vlaneseq
        %v437 = vshrl.u32 %v436, 7
        %v438 = vsub.s32 4, %v437
        %v439 = vrot.slane %v368, %v438
        %v448 = vlaneseq
        %v449 = vshrl.u32 %v448, 7
        %v450 = vsub.s32 0, %v449
        %v451 = vrot.slane %v411, %v450
        %v452 = vlaneseq
        %v453 = vshrl.u32 %v452, 7
        %v454 = vsub.s32 0, %v453
        %v455 = vrot.slane %v415, %v454
        %v456 = vlaneseq
        %v457 = vshrl.u32 %v456, 7
        %v458 = vsub.s32 0, %v457
        %v459 = vrot.slane %v419, %v458
        %v460 = vlaneseq
        %v461 = vshrl.u32 %v460, 7
        %v462 = vsub.s32 0, %v461
        %v463 = vrot.slane %v423, %v462
        %v464 = vlaneseq
        %v465 = vshrl.u32 %v464, 7
        %v466 = vsub.s32 0, %v465
        %v467 = vrot.slane %v427, %v466
        %v468 = vlaneseq
        %v469 = vshrl.u32 %v468, 7
        %v470 = vsub.s32 0, %v469
        %v471 = vrot.slane %v431, %v470
        %v472 = vlaneseq
        %v473 = vshrl.u32 %v472, 7
        %v474 = vsub.s32 0, %v473
        %v475 = vrot.slane %v435, %v474
        %v476 = vlaneseq
        %v477 = vshrl.u32 %v476, 7
        %v478 = vsub.s32 0, %v477
        %v479 = vrot.slane %v439, %v478
        %v512 = vunpack.c.l.b16 %v372
        %v513 = vunpack.c.h.b16 %v372
        %v514 = vunpack.c.l.b16 %v373
        %v515 = vunpack.c.h.b16 %v373
        %v516 = vunpack.c.l.b16 %v374
        %v517 = vunpack.c.h.b16 %v374
        %v518 = vunpack.c.l.b16 %v375
        %v519 = vunpack.c.h.b16 %v375
        %v520 = vunpack.c.l.b16 %v376
        %v521 = vunpack.c.h.b16 %v376
        %v522 = vunpack.c.l.b16 %v377
        %v523 = vunpack.c.h.b16 %v377
        %v524 = vunpack.c.l.b16 %v378
        %v525 = vunpack.c.h.b16 %v378
        %v526 = vunpack.c.l.b16 %v379
        %v527 = vunpack.c.h.b16 %v379
        %v528 = vunpack.c.l.b16 %v380
        %v529 = vunpack.c.h.b16 %v380
        %v530 = vunpack.c.l.b16 %v381
        %v531 = vunpack.c.h.b16 %v381
        %v532 = vunpack.c.l.b16 %v382
        %v533 = vunpack.c.h.b16 %v382
        %v534 = vunpack.c.l.b16 %v383
        %v535 = vunpack.c.h.b16 %v383
        %v536 = vunpack.c.l.b16 %v384
        %v537 = vunpack.c.h.b16 %v384
        %v538 = vunpack.c.l.b16 %v385
        %v539 = vunpack.c.h.b16 %v385
        %v540 = vunpack.c.l.b16 %v386
        %v541 = vunpack.c.h.b16 %v386
        %v542 = vunpack.c.l.b16 %v387
        %v543 = vunpack.c.h.b16 %v387
        %v544 = vunpack.c.l.b16 %v388
        %v545 = vunpack.c.h.b16 %v388
        %v546 = vunpack.c.l.b16 %v389
        %v547 = vunpack.c.h.b16 %v389
        %v548 = vunpack.c.l.b16 %v390
        %v549 = vunpack.c.h.b16 %v390
        %v550 = vunpack.c.l.b16 %v391
        %v551 = vunpack.c.h.b16 %v391
        %v552 = vunpack.c.l.b16 %v392
        %v553 = vunpack.c.h.b16 %v392
        %v554 = vunpack.c.l.b16 %v393
        %v555 = vunpack.c.h.b16 %v393
        %v556 = vunpack.c.l.b16 %v394
        %v557 = vunpack.c.h.b16 %v394
        %v558 = vunpack.c.l.b16 %v395
        %v559 = vunpack.c.h.b16 %v395
        %v560 = vunpack.c.l.b16 %v396
        %v561 = vunpack.c.h.b16 %v396
        %v562 = vunpack.c.l.b16 %v397
        %v563 = vunpack.c.h.b16 %v397
        %v564 = vunpack.c.l.b16 %v398
        %v565 = vunpack.c.h.b16 %v398
        %v566 = vunpack.c.l.b16 %v399
        %v567 = vunpack.c.h.b16 %v399
        %v568 = vunpack.c.l.b16 %v400
        %v569 = vunpack.c.h.b16 %v400
        %v570 = vunpack.c.l.b16 %v401
        %v571 = vunpack.c.h.b16 %v401
        %v572 = vunpack.c.l.b16 %v402
        %v573 = vunpack.c.h.b16 %v402
        %v574 = vunpack.c.l.b16 %v403
        %v575 = vunpack.c.h.b16 %v403
        %v576 = vpack.c.b16 %v520, %v512
        %v577 = vpack.c.b16 %v521, %v513
        %v578 = vpack.c.b16 %v522, %v514
        %v579 = vpack.c.b16 %v523, %v515
        %v580 = vpack.c.b16 %v524, %v516
        %v581 = vpack.c.b16 %v525, %v517
        %v582 = vpack.c.b16 %v526, %v518
        %v583 = vpack.c.b16 %v527, %v519
        %v584 = vpack.c.b16 %v536, %v528
        %v585 = vpack.c.b16 %v537, %v529
        %v586 = vpack.c.b16 %v538, %v530
        %v587 = vpack.c.b16 %v539, %v531
        %v588 = vpack.c.b16 %v540, %v532
        %v589 = vpack.c.b16 %v541, %v533
        %v590 = vpack.c.b16 %v542, %v534
        %v591 = vpack.c.b16 %v543, %v535
        %v592 = vpack.c.b16 %v552, %v544
        %v593 = vpack.c.b16 %v553, %v545
        %v594 = vpack.c.b16 %v554, %v546
        %v595 = vpack.c.b16 %v555, %v547
        %v596 = vpack.c.b16 %v556, %v548
        %v597 = vpack.c.b16 %v557, %v549
        %v598 = vpack.c.b16 %v558, %v550
        %v599 = vpack.c.b16 %v559, %v551
        %v600 = vpack.c.b16 %v568, %v560
        %v601 = vpack.c.b16 %v569, %v561
        %v602 = vpack.c.b16 %v570, %v562
        %v603 = vpack.c.b16 %v571, %v563
        %v604 = vpack.c.b16 %v572, %v564
        %v605 = vpack.c.b16 %v573, %v565
        %v606 = vpack.c.b16 %v574, %v566
        %v607 = vpack.c.b16 %v575, %v567
        %vm640 = vcmask 523264
        %v642 = vsel %vm640, %v371, 0
        %644 = vmatprep.subr.bf16.mxu0 0
        %645 = vmatpush1.bf16.msra.mxu0 0
        %646 = vmatprep.subr.bf16.mxu0 0
        %647 = vmatpush1.bf16.msra.mxu0 0
        %648 = vmatprep.subr.bf16.mxu0 0
        %649 = vmatpush1.bf16.msra.mxu0 0
        %650 = vmatprep.subr.bf16.mxu0 0
        %651 = vmatpush1.bf16.msra.mxu0 0
        %652 = vmatprep.subr.bf16.mxu0 %v601
        %653 = vmatpush1.bf16.msra.mxu0 %v600
        %654 = vmatprep.subr.bf16.mxu0 %v593
        %655 = vmatpush1.bf16.msra.mxu0 %v592
        %656 = vmatprep.subr.bf16.mxu0 %v585
        %657 = vmatpush1.bf16.msra.mxu0 %v584
        %658 = vmatprep.subr.bf16.mxu0 %v577
        %659 = vmatpush1.bf16.msra.mxu0 %v576
        %660 = vmatprep.subr.bf16.mxu0 0
        %661 = vmatpush2.bf16.msra.mxu0 0
        %662 = vmatprep.subr.bf16.mxu0 0
        %663 = vmatpush2.bf16.msra.mxu0 0
        %664 = vmatprep.subr.bf16.mxu0 0
        %665 = vmatpush2.bf16.msra.mxu0 0
        %666 = vmatprep.subr.bf16.mxu0 0
        %667 = vmatpush2.bf16.msra.mxu0 0
        %668 = vmatprep.subr.bf16.mxu0 0
        %669 = vmatpush2.bf16.msra.mxu0 0
        %670 = vmatprep.subr.bf16.mxu0 0
        %671 = vmatpush2.bf16.msra.mxu0 0
        %672 = vmatprep.subr.bf16.mxu0 0
        %673 = vmatpush2.bf16.msra.mxu0 0
        %674 = vmatprep.subr.bf16.mxu0 0
        %675 = vmatpush2.bf16.msra.mxu0 0
        %676 = vmatprep.mubr.bf16.mxu0 0
        %677 = vmatmul.mubr.bf16.gmra.mxu0 %v642
        %v678 = vpop.f32.mrf.mxu0
        %v679 = vadd.f32 %v451, %v678
        %v680 = vpop.f32.mrf.mxu0
        %v681 = vadd.f32 %v455, %v680
        %v682 = vpop.f32.mrf.mxu0
        %v683 = vpop.f32.mrf.mxu0
        %684 = vdwg.mxu0
        %685 = vmatprep.subr.bf16.mxu0 0
        %686 = vmatpush1.bf16.msra.mxu0 0
        %687 = vmatprep.subr.bf16.mxu0 0
        %688 = vmatpush1.bf16.msra.mxu0 0
        %689 = vmatprep.subr.bf16.mxu0 0
        %690 = vmatpush1.bf16.msra.mxu0 0
        %691 = vmatprep.subr.bf16.mxu0 0
        %692 = vmatpush1.bf16.msra.mxu0 0
        %693 = vmatprep.subr.bf16.mxu0 %v603
        %694 = vmatpush1.bf16.msra.mxu0 %v602
        %695 = vmatprep.subr.bf16.mxu0 %v595
        %696 = vmatpush1.bf16.msra.mxu0 %v594
        %697 = vmatprep.subr.bf16.mxu0 %v587
        %698 = vmatpush1.bf16.msra.mxu0 %v586
        %699 = vmatprep.subr.bf16.mxu0 %v579
        %700 = vmatpush1.bf16.msra.mxu0 %v578
        %701 = vmatprep.subr.bf16.mxu0 0
        %702 = vmatpush2.bf16.msra.mxu0 0
        %703 = vmatprep.subr.bf16.mxu0 0
        %704 = vmatpush2.bf16.msra.mxu0 0
        %705 = vmatprep.subr.bf16.mxu0 0
        %706 = vmatpush2.bf16.msra.mxu0 0
        %707 = vmatprep.subr.bf16.mxu0 0
        %708 = vmatpush2.bf16.msra.mxu0 0
        %709 = vmatprep.subr.bf16.mxu0 0
        %710 = vmatpush2.bf16.msra.mxu0 0
        %711 = vmatprep.subr.bf16.mxu0 0
        %712 = vmatpush2.bf16.msra.mxu0 0
        %713 = vmatprep.subr.bf16.mxu0 0
        %714 = vmatpush2.bf16.msra.mxu0 0
        %715 = vmatprep.subr.bf16.mxu0 0
        %716 = vmatpush2.bf16.msra.mxu0 0
        %717 = vmatprep.mubr.bf16.mxu0 0
        %718 = vmatmul.mubr.bf16.gmra.mxu0 %v642
        %v719 = vpop.f32.mrf.mxu0
        %v720 = vadd.f32 %v459, %v719
        %v721 = vpop.f32.mrf.mxu0
        %v722 = vadd.f32 %v463, %v721
        %v723 = vpop.f32.mrf.mxu0
        %v724 = vpop.f32.mrf.mxu0
        %725 = vdwg.mxu0
        %726 = vmatprep.subr.bf16.mxu0 0
        %727 = vmatpush1.bf16.msra.mxu0 0
        %728 = vmatprep.subr.bf16.mxu0 0
        %729 = vmatpush1.bf16.msra.mxu0 0
        %730 = vmatprep.subr.bf16.mxu0 0
        %731 = vmatpush1.bf16.msra.mxu0 0
        %732 = vmatprep.subr.bf16.mxu0 0
        %733 = vmatpush1.bf16.msra.mxu0 0
        %734 = vmatprep.subr.bf16.mxu0 %v605
        %735 = vmatpush1.bf16.msra.mxu0 %v604
        %736 = vmatprep.subr.bf16.mxu0 %v597
        %737 = vmatpush1.bf16.msra.mxu0 %v596
        %738 = vmatprep.subr.bf16.mxu0 %v589
        %739 = vmatpush1.bf16.msra.mxu0 %v588
        %740 = vmatprep.subr.bf16.mxu0 %v581
        %741 = vmatpush1.bf16.msra.mxu0 %v580
        %742 = vmatprep.subr.bf16.mxu0 0
        %743 = vmatpush2.bf16.msra.mxu0 0
        %744 = vmatprep.subr.bf16.mxu0 0
        %745 = vmatpush2.bf16.msra.mxu0 0
        %746 = vmatprep.subr.bf16.mxu0 0
        %747 = vmatpush2.bf16.msra.mxu0 0
        %748 = vmatprep.subr.bf16.mxu0 0
        %749 = vmatpush2.bf16.msra.mxu0 0
        %750 = vmatprep.subr.bf16.mxu0 0
        %751 = vmatpush2.bf16.msra.mxu0 0
        %752 = vmatprep.subr.bf16.mxu0 0
        %753 = vmatpush2.bf16.msra.mxu0 0
        %754 = vmatprep.subr.bf16.mxu0 0
        %755 = vmatpush2.bf16.msra.mxu0 0
        %756 = vmatprep.subr.bf16.mxu0 0
        %757 = vmatpush2.bf16.msra.mxu0 0
        %758 = vmatprep.mubr.bf16.mxu0 0
        %759 = vmatmul.mubr.bf16.gmra.mxu0 %v642
        %v760 = vpop.f32.mrf.mxu0
        %v761 = vadd.f32 %v467, %v760
        %v762 = vpop.f32.mrf.mxu0
        %v763 = vadd.f32 %v471, %v762
        %v764 = vpop.f32.mrf.mxu0
        %v765 = vpop.f32.mrf.mxu0
        %766 = vdwg.mxu0
        %767 = vmatprep.subr.bf16.mxu0 0
        %768 = vmatpush1.bf16.msra.mxu0 0
        %769 = vmatprep.subr.bf16.mxu0 0
        %770 = vmatpush1.bf16.msra.mxu0 0
        %771 = vmatprep.subr.bf16.mxu0 0
        %772 = vmatpush1.bf16.msra.mxu0 0
        %773 = vmatprep.subr.bf16.mxu0 0
        %774 = vmatpush1.bf16.msra.mxu0 0
        %775 = vmatprep.subr.bf16.mxu0 %v607
        %776 = vmatpush1.bf16.msra.mxu0 %v606
        %777 = vmatprep.subr.bf16.mxu0 %v599
        %778 = vmatpush1.bf16.msra.mxu0 %v598
        %779 = vmatprep.subr.bf16.mxu0 %v591
        %780 = vmatpush1.bf16.msra.mxu0 %v590
        %781 = vmatprep.subr.bf16.mxu0 %v583
        %782 = vmatpush1.bf16.msra.mxu0 %v582
        %783 = vmatprep.subr.bf16.mxu0 0
        %784 = vmatpush2.bf16.msra.mxu0 0
        %785 = vmatprep.subr.bf16.mxu0 0
        %786 = vmatpush2.bf16.msra.mxu0 0
        %787 = vmatprep.subr.bf16.mxu0 0
        %788 = vmatpush2.bf16.msra.mxu0 0
        %789 = vmatprep.subr.bf16.mxu0 0
        %790 = vmatpush2.bf16.msra.mxu0 0
        %791 = vmatprep.subr.bf16.mxu0 0
        %792 = vmatpush2.bf16.msra.mxu0 0
        %793 = vmatprep.subr.bf16.mxu0 0
        %794 = vmatpush2.bf16.msra.mxu0 0
        %795 = vmatprep.subr.bf16.mxu0 0
        %796 = vmatpush2.bf16.msra.mxu0 0
        %797 = vmatprep.subr.bf16.mxu0 0
        %798 = vmatpush2.bf16.msra.mxu0 0
        %799 = vmatprep.mubr.bf16.mxu0 0
        %800 = vmatmul.mubr.bf16.gmra.mxu0 %v642
        %v801 = vpop.f32.mrf.mxu0
        %v802 = vadd.f32 %v475, %v801
        %v803 = vpop.f32.mrf.mxu0
        %v804 = vadd.f32 %v479, %v803
        %v805 = vpop.f32.mrf.mxu0
        %v806 = vpop.f32.mrf.mxu0
        %807 = vdwg.mxu0
        %v808 = vadd.f32 %v679, %v681
        %v809 = vadd.f32 %v808, %v720
        %v810 = vadd.f32 %v809, %v722
        %v811 = vadd.f32 %v810, %v761
        %v812 = vadd.f32 %v811, %v763
        %v813 = vadd.f32 %v812, %v802
        %v814 = vadd.f32 %v813, %v804
        %815 = vadd.xlane.f32.xlu0 %v814
        %v816 = vpop.xlane.xlu0 %815
        %v817 = vrcp.pop 1024.0
        %v818 = vmul.f32 %v816, %v817
        %v819 = vsub.f32 %v679, %v818
        %v820 = vsub.f32 %v681, %v818
        %v821 = vsub.f32 %v720, %v818
        %v822 = vsub.f32 %v722, %v818
        %v823 = vsub.f32 %v761, %v818
        %v824 = vsub.f32 %v763, %v818
        %v825 = vsub.f32 %v802, %v818
        %v826 = vsub.f32 %v804, %v818
        %v827 = vmul.f32 %v819, %v819
        %v828 = vmul.f32 %v820, %v820
        %v829 = vmul.f32 %v821, %v821
        %v830 = vmul.f32 %v822, %v822
        %v831 = vmul.f32 %v823, %v823
        %v832 = vmul.f32 %v824, %v824
        %v833 = vmul.f32 %v825, %v825
        %v834 = vmul.f32 %v826, %v826
        %v835 = vadd.f32 %v827, %v828
        %v836 = vadd.f32 %v835, %v829
        %v837 = vadd.f32 %v836, %v830
        %v838 = vadd.f32 %v837, %v831
        %v839 = vadd.f32 %v838, %v832
        %v840 = vadd.f32 %v839, %v833
        %v841 = vadd.f32 %v840, %v834
        %842 = vadd.xlane.f32.xlu0 %v841
        %v843 = vpop.xlane.xlu0 %842
        %v844 = vmul.f32 %v843, %v817
        %v845 = vadd.f32 %v844, 1e-05
        %v846 = vrsqrt.pop %v845
        %v847 = vmul.f32 %v819, %v846
        %v848 = vmul.f32 %v820, %v846
        %v849 = vmul.f32 %v821, %v846
        %v850 = vmul.f32 %v822, %v846
        %v851 = vmul.f32 %v823, %v846
        %v852 = vmul.f32 %v824, %v846
        %v853 = vmul.f32 %v825, %v846
        %v854 = vmul.f32 %v826, %v846
        %v855 = vlaneseq
        %v856 = vshrl.u32 %v855, 7
        %v857 = vsub.s32 1, %v856
        %v858 = vrot.slane %v365, %v857
        %v859 = vlaneseq
        %v860 = vshrl.u32 %v859, 7
        %v861 = vsub.s32 5, %v860
        %v862 = vrot.slane %v365, %v861
        %v863 = vlaneseq
        %v864 = vshrl.u32 %v863, 7
        %v865 = vsub.s32 1, %v864
        %v866 = vrot.slane %v366, %v865
        %v867 = vlaneseq
        %v868 = vshrl.u32 %v867, 7
        %v869 = vsub.s32 5, %v868
        %v870 = vrot.slane %v366, %v869
        %v871 = vlaneseq
        %v872 = vshrl.u32 %v871, 7
        %v873 = vsub.s32 1, %v872
        %v874 = vrot.slane %v367, %v873
        %v875 = vlaneseq
        %v876 = vshrl.u32 %v875, 7
        %v877 = vsub.s32 5, %v876
        %v878 = vrot.slane %v367, %v877
        %v879 = vlaneseq
        %v880 = vshrl.u32 %v879, 7
        %v881 = vsub.s32 1, %v880
        %v882 = vrot.slane %v368, %v881
        %v883 = vlaneseq
        %v884 = vshrl.u32 %v883, 7
        %v885 = vsub.s32 5, %v884
        %v886 = vrot.slane %v368, %v885
        %v895 = vlaneseq
        %v896 = vshrl.u32 %v895, 7
        %v897 = vsub.s32 1, %v896
        %v898 = vrot.slane %v858, %v897
        %v899 = vlaneseq
        %v900 = vshrl.u32 %v899, 7
        %v901 = vsub.s32 1, %v900
        %v902 = vrot.slane %v862, %v901
        %v903 = vlaneseq
        %v904 = vshrl.u32 %v903, 7
        %v905 = vsub.s32 1, %v904
        %v906 = vrot.slane %v866, %v905
        %v907 = vlaneseq
        %v908 = vshrl.u32 %v907, 7
        %v909 = vsub.s32 1, %v908
        %v910 = vrot.slane %v870, %v909
        %v911 = vlaneseq
        %v912 = vshrl.u32 %v911, 7
        %v913 = vsub.s32 1, %v912
        %v914 = vrot.slane %v874, %v913
        %v915 = vlaneseq
        %v916 = vshrl.u32 %v915, 7
        %v917 = vsub.s32 1, %v916
        %v918 = vrot.slane %v878, %v917
        %v919 = vlaneseq
        %v920 = vshrl.u32 %v919, 7
        %v921 = vsub.s32 1, %v920
        %v922 = vrot.slane %v882, %v921
        %v923 = vlaneseq
        %v924 = vshrl.u32 %v923, 7
        %v925 = vsub.s32 1, %v924
        %v926 = vrot.slane %v886, %v925
        %v927 = vmul.f32 %v847, %v898
        %v928 = vmul.f32 %v848, %v902
        %v929 = vmul.f32 %v849, %v906
        %v930 = vmul.f32 %v850, %v910
        %v931 = vmul.f32 %v851, %v914
        %v932 = vmul.f32 %v852, %v918
        %v933 = vmul.f32 %v853, %v922
        %v934 = vmul.f32 %v854, %v926
        %v935 = vlaneseq
        %v936 = vshrl.u32 %v935, 7
        %v937 = vsub.s32 2, %v936
        %v938 = vrot.slane %v365, %v937
        %v939 = vlaneseq
        %v940 = vshrl.u32 %v939, 7
        %v941 = vsub.s32 6, %v940
        %v942 = vrot.slane %v365, %v941
        %v943 = vlaneseq
        %v944 = vshrl.u32 %v943, 7
        %v945 = vsub.s32 2, %v944
        %v946 = vrot.slane %v366, %v945
        %v947 = vlaneseq
        %v948 = vshrl.u32 %v947, 7
        %v949 = vsub.s32 6, %v948
        %v950 = vrot.slane %v366, %v949
        %v951 = vlaneseq
        %v952 = vshrl.u32 %v951, 7
        %v953 = vsub.s32 2, %v952
        %v954 = vrot.slane %v367, %v953
        %v955 = vlaneseq
        %v956 = vshrl.u32 %v955, 7
        %v957 = vsub.s32 6, %v956
        %v958 = vrot.slane %v367, %v957
        %v959 = vlaneseq
        %v960 = vshrl.u32 %v959, 7
        %v961 = vsub.s32 2, %v960
        %v962 = vrot.slane %v368, %v961
        %v963 = vlaneseq
        %v964 = vshrl.u32 %v963, 7
        %v965 = vsub.s32 6, %v964
        %v966 = vrot.slane %v368, %v965
        %v975 = vlaneseq
        %v976 = vshrl.u32 %v975, 7
        %v977 = vsub.s32 2, %v976
        %v978 = vrot.slane %v938, %v977
        %v979 = vlaneseq
        %v980 = vshrl.u32 %v979, 7
        %v981 = vsub.s32 2, %v980
        %v982 = vrot.slane %v942, %v981
        %v983 = vlaneseq
        %v984 = vshrl.u32 %v983, 7
        %v985 = vsub.s32 2, %v984
        %v986 = vrot.slane %v946, %v985
        %v987 = vlaneseq
        %v988 = vshrl.u32 %v987, 7
        %v989 = vsub.s32 2, %v988
        %v990 = vrot.slane %v950, %v989
        %v991 = vlaneseq
        %v992 = vshrl.u32 %v991, 7
        %v993 = vsub.s32 2, %v992
        %v994 = vrot.slane %v954, %v993
        %v995 = vlaneseq
        %v996 = vshrl.u32 %v995, 7
        %v997 = vsub.s32 2, %v996
        %v998 = vrot.slane %v958, %v997
        %v999 = vlaneseq
        %v1000 = vshrl.u32 %v999, 7
        %v1001 = vsub.s32 2, %v1000
        %v1002 = vrot.slane %v962, %v1001
        %v1003 = vlaneseq
        %v1004 = vshrl.u32 %v1003, 7
        %v1005 = vsub.s32 2, %v1004
        %v1006 = vrot.slane %v966, %v1005
        %v1007 = vadd.f32 %v927, %v978
        %v1008 = vadd.f32 %v928, %v982
        %v1009 = vadd.f32 %v929, %v986
        %v1010 = vadd.f32 %v930, %v990
        %v1011 = vadd.f32 %v931, %v994
        %v1012 = vadd.f32 %v932, %v998
        %v1013 = vadd.f32 %v933, %v1002
        %v1014 = vadd.f32 %v934, %v1006
        %v1015 = vmax.f32 %v1007, 0.0
        %v1016 = vmax.f32 %v1008, 0.0
        %v1017 = vmax.f32 %v1009, 0.0
        %v1018 = vmax.f32 %v1010, 0.0
        %v1019 = vmax.f32 %v1011, 0.0
        %v1020 = vmax.f32 %v1012, 0.0
        %v1021 = vmax.f32 %v1013, 0.0
        %v1022 = vmax.f32 %v1014, 0.0
        %v1023 = vpack.c.bf16 %v1015, %v1015
        %v1024 = vpack.c.bf16 %v1016, %v1016
        %v1025 = vpack.c.bf16 %v1017, %v1017
        %v1026 = vpack.c.bf16 %v1018, %v1018
        %v1027 = vpack.c.bf16 %v1019, %v1019
        %v1028 = vpack.c.bf16 %v1020, %v1020
        %v1029 = vpack.c.bf16 %v1021, %v1021
        %v1030 = vpack.c.bf16 %v1022, %v1022
        %v1031 = vld [vmem:[#allocation7] sm:$0xff]
        %v1032 = vld [vmem:[#allocation7 + $0x8] sm:$0xff]
        %v1033 = vld [vmem:[#allocation7 + $0x10] sm:$0xff]
        %v1034 = vld [vmem:[#allocation7 + $0x18] sm:$0xff]
        %v1035 = vld [vmem:[#allocation7 + $0x20] sm:$0xff]
        %v1036 = vld [vmem:[#allocation7 + $0x28] sm:$0xff]
        %v1037 = vld [vmem:[#allocation7 + $0x30] sm:$0xff]
        %v1038 = vld [vmem:[#allocation7 + $0x38] sm:$0xff]
        %v1039 = vld [vmem:[#allocation7 + $0x40] sm:$0xff]
        %v1040 = vld [vmem:[#allocation7 + $0x48] sm:$0xff]
        %v1041 = vld [vmem:[#allocation7 + $0x50] sm:$0xff]
        %v1042 = vld [vmem:[#allocation7 + $0x58] sm:$0xff]
        %v1043 = vld [vmem:[#allocation7 + $0x60] sm:$0xff]
        %v1044 = vld [vmem:[#allocation7 + $0x68] sm:$0xff]
        %v1045 = vld [vmem:[#allocation7 + $0x70] sm:$0xff]
        %v1046 = vld [vmem:[#allocation7 + $0x78] sm:$0xff]
        %v1047 = vld [vmem:[#allocation7 + $0x80] sm:$0xff]
        %v1048 = vld [vmem:[#allocation7 + $0x88] sm:$0xff]
        %v1049 = vld [vmem:[#allocation7 + $0x90] sm:$0xff]
        %v1050 = vld [vmem:[#allocation7 + $0x98] sm:$0xff]
        %v1051 = vld [vmem:[#allocation7 + $0xa0] sm:$0xff]
        %v1052 = vld [vmem:[#allocation7 + $0xa8] sm:$0xff]
        %v1053 = vld [vmem:[#allocation7 + $0xb0] sm:$0xff]
        %v1054 = vld [vmem:[#allocation7 + $0xb8] sm:$0xff]
        %v1055 = vld [vmem:[#allocation7 + $0xc0] sm:$0xff]
        %v1056 = vld [vmem:[#allocation7 + $0xc8] sm:$0xff]
        %v1057 = vld [vmem:[#allocation7 + $0xd0] sm:$0xff]
        %v1058 = vld [vmem:[#allocation7 + $0xd8] sm:$0xff]
        %v1059 = vld [vmem:[#allocation7 + $0xe0] sm:$0xff]
        %v1060 = vld [vmem:[#allocation7 + $0xe8] sm:$0xff]
        %v1061 = vld [vmem:[#allocation7 + $0xf0] sm:$0xff]
        %v1062 = vld [vmem:[#allocation7 + $0xf8] sm:$0xff]
        %v1063 = vld [vmem:[#allocation7 + $0x100] sm:$0xff]
        %v1064 = vld [vmem:[#allocation7 + $0x108] sm:$0xff]
        %v1065 = vld [vmem:[#allocation7 + $0x110] sm:$0xff]
        %v1066 = vld [vmem:[#allocation7 + $0x118] sm:$0xff]
        %v1067 = vld [vmem:[#allocation7 + $0x120] sm:$0xff]
        %v1068 = vld [vmem:[#allocation7 + $0x128] sm:$0xff]
        %v1069 = vld [vmem:[#allocation7 + $0x130] sm:$0xff]
        %v1070 = vld [vmem:[#allocation7 + $0x138] sm:$0xff]
        %v1071 = vld [vmem:[#allocation7 + $0x140] sm:$0xff]
        %v1072 = vld [vmem:[#allocation7 + $0x148] sm:$0xff]
        %v1073 = vld [vmem:[#allocation7 + $0x150] sm:$0xff]
        %v1074 = vld [vmem:[#allocation7 + $0x158] sm:$0xff]
        %v1075 = vld [vmem:[#allocation7 + $0x160] sm:$0xff]
        %v1076 = vld [vmem:[#allocation7 + $0x168] sm:$0xff]
        %v1077 = vld [vmem:[#allocation7 + $0x170] sm:$0xff]
        %v1078 = vld [vmem:[#allocation7 + $0x178] sm:$0xff]
        %v1079 = vld [vmem:[#allocation7 + $0x180] sm:$0xff]
        %v1080 = vld [vmem:[#allocation7 + $0x188] sm:$0xff]
        %v1081 = vld [vmem:[#allocation7 + $0x190] sm:$0xff]
        %v1082 = vld [vmem:[#allocation7 + $0x198] sm:$0xff]
        %v1083 = vld [vmem:[#allocation7 + $0x1a0] sm:$0xff]
        %v1084 = vld [vmem:[#allocation7 + $0x1a8] sm:$0xff]
        %v1085 = vld [vmem:[#allocation7 + $0x1b0] sm:$0xff]
        %v1086 = vld [vmem:[#allocation7 + $0x1b8] sm:$0xff]
        %v1087 = vld [vmem:[#allocation7 + $0x1c0] sm:$0xff]
        %v1088 = vld [vmem:[#allocation7 + $0x1c8] sm:$0xff]
        %v1089 = vld [vmem:[#allocation7 + $0x1d0] sm:$0xff]
        %v1090 = vld [vmem:[#allocation7 + $0x1d8] sm:$0xff]
        %v1091 = vld [vmem:[#allocation7 + $0x1e0] sm:$0xff]
        %v1092 = vld [vmem:[#allocation7 + $0x1e8] sm:$0xff]
        %v1093 = vld [vmem:[#allocation7 + $0x1f0] sm:$0xff]
        %v1094 = vld [vmem:[#allocation7 + $0x1f8] sm:$0xff]
        %v1095 = vld [vmem:[#allocation7 + $0x200] sm:$0xff]
        %v1096 = vld [vmem:[#allocation7 + $0x208] sm:$0xff]
        %v1097 = vld [vmem:[#allocation7 + $0x210] sm:$0xff]
        %v1098 = vld [vmem:[#allocation7 + $0x218] sm:$0xff]
        %v1099 = vld [vmem:[#allocation7 + $0x220] sm:$0xff]
        %v1100 = vld [vmem:[#allocation7 + $0x228] sm:$0xff]
        %v1101 = vld [vmem:[#allocation7 + $0x230] sm:$0xff]
        %v1102 = vld [vmem:[#allocation7 + $0x238] sm:$0xff]
        %v1103 = vld [vmem:[#allocation7 + $0x240] sm:$0xff]
        %v1104 = vld [vmem:[#allocation7 + $0x248] sm:$0xff]
        %v1105 = vld [vmem:[#allocation7 + $0x250] sm:$0xff]
        %v1106 = vld [vmem:[#allocation7 + $0x258] sm:$0xff]
        %v1107 = vld [vmem:[#allocation7 + $0x260] sm:$0xff]
        %v1108 = vld [vmem:[#allocation7 + $0x268] sm:$0xff]
        %v1109 = vld [vmem:[#allocation7 + $0x270] sm:$0xff]
        %v1110 = vld [vmem:[#allocation7 + $0x278] sm:$0xff]
        %v1111 = vld [vmem:[#allocation7 + $0x280] sm:$0xff]
        %v1112 = vld [vmem:[#allocation7 + $0x288] sm:$0xff]
        %v1113 = vld [vmem:[#allocation7 + $0x290] sm:$0xff]
        %v1114 = vld [vmem:[#allocation7 + $0x298] sm:$0xff]
        %v1115 = vld [vmem:[#allocation7 + $0x2a0] sm:$0xff]
        %v1116 = vld [vmem:[#allocation7 + $0x2a8] sm:$0xff]
        %v1117 = vld [vmem:[#allocation7 + $0x2b0] sm:$0xff]
        %v1118 = vld [vmem:[#allocation7 + $0x2b8] sm:$0xff]
        %v1119 = vld [vmem:[#allocation7 + $0x2c0] sm:$0xff]
        %v1120 = vld [vmem:[#allocation7 + $0x2c8] sm:$0xff]
        %v1121 = vld [vmem:[#allocation7 + $0x2d0] sm:$0xff]
        %v1122 = vld [vmem:[#allocation7 + $0x2d8] sm:$0xff]
        %v1123 = vld [vmem:[#allocation7 + $0x2e0] sm:$0xff]
        %v1124 = vld [vmem:[#allocation7 + $0x2e8] sm:$0xff]
        %v1125 = vld [vmem:[#allocation7 + $0x2f0] sm:$0xff]
        %v1126 = vld [vmem:[#allocation7 + $0x2f8] sm:$0xff]
        %v1127 = vld [vmem:[#allocation7 + $0x300] sm:$0xff]
        %v1128 = vld [vmem:[#allocation7 + $0x308] sm:$0xff]
        %v1129 = vld [vmem:[#allocation7 + $0x310] sm:$0xff]
        %v1130 = vld [vmem:[#allocation7 + $0x318] sm:$0xff]
        %v1131 = vld [vmem:[#allocation7 + $0x320] sm:$0xff]
        %v1132 = vld [vmem:[#allocation7 + $0x328] sm:$0xff]
        %v1133 = vld [vmem:[#allocation7 + $0x330] sm:$0xff]
        %v1134 = vld [vmem:[#allocation7 + $0x338] sm:$0xff]
        %v1135 = vld [vmem:[#allocation7 + $0x340] sm:$0xff]
        %v1136 = vld [vmem:[#allocation7 + $0x348] sm:$0xff]
        %v1137 = vld [vmem:[#allocation7 + $0x350] sm:$0xff]
        %v1138 = vld [vmem:[#allocation7 + $0x358] sm:$0xff]
        %v1139 = vld [vmem:[#allocation7 + $0x360] sm:$0xff]
        %v1140 = vld [vmem:[#allocation7 + $0x368] sm:$0xff]
        %v1141 = vld [vmem:[#allocation7 + $0x370] sm:$0xff]
        %v1142 = vld [vmem:[#allocation7 + $0x378] sm:$0xff]
        %v1143 = vld [vmem:[#allocation7 + $0x380] sm:$0xff]
        %v1144 = vld [vmem:[#allocation7 + $0x388] sm:$0xff]
        %v1145 = vld [vmem:[#allocation7 + $0x390] sm:$0xff]
        %v1146 = vld [vmem:[#allocation7 + $0x398] sm:$0xff]
        %v1147 = vld [vmem:[#allocation7 + $0x3a0] sm:$0xff]
        %v1148 = vld [vmem:[#allocation7 + $0x3a8] sm:$0xff]
        %v1149 = vld [vmem:[#allocation7 + $0x3b0] sm:$0xff]
        %v1150 = vld [vmem:[#allocation7 + $0x3b8] sm:$0xff]
        %v1151 = vld [vmem:[#allocation7 + $0x3c0] sm:$0xff]
        %v1152 = vld [vmem:[#allocation7 + $0x3c8] sm:$0xff]
        %v1153 = vld [vmem:[#allocation7 + $0x3d0] sm:$0xff]
        %v1154 = vld [vmem:[#allocation7 + $0x3d8] sm:$0xff]
        %v1155 = vld [vmem:[#allocation7 + $0x3e0] sm:$0xff]
        %v1156 = vld [vmem:[#allocation7 + $0x3e8] sm:$0xff]
        %v1157 = vld [vmem:[#allocation7 + $0x3f0] sm:$0xff]
        %v1158 = vld [vmem:[#allocation7 + $0x3f8] sm:$0xff]
        %v1159 = vld [vmem:[#allocation7 + $0x400] sm:$0xff]
        %v1160 = vld [vmem:[#allocation7 + $0x408] sm:$0xff]
        %v1161 = vld [vmem:[#allocation7 + $0x410] sm:$0xff]
        %v1162 = vld [vmem:[#allocation7 + $0x418] sm:$0xff]
        %v1163 = vld [vmem:[#allocation7 + $0x420] sm:$0xff]
        %v1164 = vld [vmem:[#allocation7 + $0x428] sm:$0xff]
        %v1165 = vld [vmem:[#allocation7 + $0x430] sm:$0xff]
        %v1166 = vld [vmem:[#allocation7 + $0x438] sm:$0xff]
        %v1167 = vld [vmem:[#allocation7 + $0x440] sm:$0xff]
        %v1168 = vld [vmem:[#allocation7 + $0x448] sm:$0xff]
        %v1169 = vld [vmem:[#allocation7 + $0x450] sm:$0xff]
        %v1170 = vld [vmem:[#allocation7 + $0x458] sm:$0xff]
        %v1171 = vld [vmem:[#allocation7 + $0x460] sm:$0xff]
        %v1172 = vld [vmem:[#allocation7 + $0x468] sm:$0xff]
        %v1173 = vld [vmem:[#allocation7 + $0x470] sm:$0xff]
        %v1174 = vld [vmem:[#allocation7 + $0x478] sm:$0xff]
        %v1175 = vld [vmem:[#allocation7 + $0x480] sm:$0xff]
        %v1176 = vld [vmem:[#allocation7 + $0x488] sm:$0xff]
        %v1177 = vld [vmem:[#allocation7 + $0x490] sm:$0xff]
        %v1178 = vld [vmem:[#allocation7 + $0x498] sm:$0xff]
        %v1179 = vld [vmem:[#allocation7 + $0x4a0] sm:$0xff]
        %v1180 = vld [vmem:[#allocation7 + $0x4a8] sm:$0xff]
        %v1181 = vld [vmem:[#allocation7 + $0x4b0] sm:$0xff]
        %v1182 = vld [vmem:[#allocation7 + $0x4b8] sm:$0xff]
        %v1183 = vld [vmem:[#allocation7 + $0x4c0] sm:$0xff]
        %v1184 = vld [vmem:[#allocation7 + $0x4c8] sm:$0xff]
        %v1185 = vld [vmem:[#allocation7 + $0x4d0] sm:$0xff]
        %v1186 = vld [vmem:[#allocation7 + $0x4d8] sm:$0xff]
        %v1187 = vld [vmem:[#allocation7 + $0x4e0] sm:$0xff]
        %v1188 = vld [vmem:[#allocation7 + $0x4e8] sm:$0xff]
        %v1189 = vld [vmem:[#allocation7 + $0x4f0] sm:$0xff]
        %v1190 = vld [vmem:[#allocation7 + $0x4f8] sm:$0xff]
        %v1191 = vld [vmem:[#allocation7 + $0x500] sm:$0xff]
        %v1192 = vld [vmem:[#allocation7 + $0x508] sm:$0xff]
        %v1193 = vld [vmem:[#allocation7 + $0x510] sm:$0xff]
        %v1194 = vld [vmem:[#allocation7 + $0x518] sm:$0xff]
        %v1195 = vld [vmem:[#allocation7 + $0x520] sm:$0xff]
        %v1196 = vld [vmem:[#allocation7 + $0x528] sm:$0xff]
        %v1197 = vld [vmem:[#allocation7 + $0x530] sm:$0xff]
        %v1198 = vld [vmem:[#allocation7 + $0x538] sm:$0xff]
        %v1199 = vld [vmem:[#allocation7 + $0x540] sm:$0xff]
        %v1200 = vld [vmem:[#allocation7 + $0x548] sm:$0xff]
        %v1201 = vld [vmem:[#allocation7 + $0x550] sm:$0xff]
        %v1202 = vld [vmem:[#allocation7 + $0x558] sm:$0xff]
        %v1203 = vld [vmem:[#allocation7 + $0x560] sm:$0xff]
        %v1204 = vld [vmem:[#allocation7 + $0x568] sm:$0xff]
        %v1205 = vld [vmem:[#allocation7 + $0x570] sm:$0xff]
        %v1206 = vld [vmem:[#allocation7 + $0x578] sm:$0xff]
        %v1207 = vld [vmem:[#allocation7 + $0x580] sm:$0xff]
        %v1208 = vld [vmem:[#allocation7 + $0x588] sm:$0xff]
        %v1209 = vld [vmem:[#allocation7 + $0x590] sm:$0xff]
        %v1210 = vld [vmem:[#allocation7 + $0x598] sm:$0xff]
        %v1211 = vld [vmem:[#allocation7 + $0x5a0] sm:$0xff]
        %v1212 = vld [vmem:[#allocation7 + $0x5a8] sm:$0xff]
        %v1213 = vld [vmem:[#allocation7 + $0x5b0] sm:$0xff]
        %v1214 = vld [vmem:[#allocation7 + $0x5b8] sm:$0xff]
        %v1215 = vld [vmem:[#allocation7 + $0x5c0] sm:$0xff]
        %v1216 = vld [vmem:[#allocation7 + $0x5c8] sm:$0xff]
        %v1217 = vld [vmem:[#allocation7 + $0x5d0] sm:$0xff]
        %v1218 = vld [vmem:[#allocation7 + $0x5d8] sm:$0xff]
        %v1219 = vld [vmem:[#allocation7 + $0x5e0] sm:$0xff]
        %v1220 = vld [vmem:[#allocation7 + $0x5e8] sm:$0xff]
        %v1221 = vld [vmem:[#allocation7 + $0x5f0] sm:$0xff]
        %v1222 = vld [vmem:[#allocation7 + $0x5f8] sm:$0xff]
        %v1223 = vld [vmem:[#allocation7 + $0x600] sm:$0xff]
        %v1224 = vld [vmem:[#allocation7 + $0x608] sm:$0xff]
        %v1225 = vld [vmem:[#allocation7 + $0x610] sm:$0xff]
        %v1226 = vld [vmem:[#allocation7 + $0x618] sm:$0xff]
        %v1227 = vld [vmem:[#allocation7 + $0x620] sm:$0xff]
        %v1228 = vld [vmem:[#allocation7 + $0x628] sm:$0xff]
        %v1229 = vld [vmem:[#allocation7 + $0x630] sm:$0xff]
        %v1230 = vld [vmem:[#allocation7 + $0x638] sm:$0xff]
        %v1231 = vld [vmem:[#allocation7 + $0x640] sm:$0xff]
        %v1232 = vld [vmem:[#allocation7 + $0x648] sm:$0xff]
        %v1233 = vld [vmem:[#allocation7 + $0x650] sm:$0xff]
        %v1234 = vld [vmem:[#allocation7 + $0x658] sm:$0xff]
        %v1235 = vld [vmem:[#allocation7 + $0x660] sm:$0xff]
        %v1236 = vld [vmem:[#allocation7 + $0x668] sm:$0xff]
        %v1237 = vld [vmem:[#allocation7 + $0x670] sm:$0xff]
        %v1238 = vld [vmem:[#allocation7 + $0x678] sm:$0xff]
        %v1239 = vld [vmem:[#allocation7 + $0x680] sm:$0xff]
        %v1240 = vld [vmem:[#allocation7 + $0x688] sm:$0xff]
        %v1241 = vld [vmem:[#allocation7 + $0x690] sm:$0xff]
        %v1242 = vld [vmem:[#allocation7 + $0x698] sm:$0xff]
        %v1243 = vld [vmem:[#allocation7 + $0x6a0] sm:$0xff]
        %v1244 = vld [vmem:[#allocation7 + $0x6a8] sm:$0xff]
        %v1245 = vld [vmem:[#allocation7 + $0x6b0] sm:$0xff]
        %v1246 = vld [vmem:[#allocation7 + $0x6b8] sm:$0xff]
        %v1247 = vld [vmem:[#allocation7 + $0x6c0] sm:$0xff]
        %v1248 = vld [vmem:[#allocation7 + $0x6c8] sm:$0xff]
        %v1249 = vld [vmem:[#allocation7 + $0x6d0] sm:$0xff]
        %v1250 = vld [vmem:[#allocation7 + $0x6d8] sm:$0xff]
        %v1251 = vld [vmem:[#allocation7 + $0x6e0] sm:$0xff]
        %v1252 = vld [vmem:[#allocation7 + $0x6e8] sm:$0xff]
        %v1253 = vld [vmem:[#allocation7 + $0x6f0] sm:$0xff]
        %v1254 = vld [vmem:[#allocation7 + $0x6f8] sm:$0xff]
        %v1255 = vld [vmem:[#allocation7 + $0x700] sm:$0xff]
        %v1256 = vld [vmem:[#allocation7 + $0x708] sm:$0xff]
        %v1257 = vld [vmem:[#allocation7 + $0x710] sm:$0xff]
        %v1258 = vld [vmem:[#allocation7 + $0x718] sm:$0xff]
        %v1259 = vld [vmem:[#allocation7 + $0x720] sm:$0xff]
        %v1260 = vld [vmem:[#allocation7 + $0x728] sm:$0xff]
        %v1261 = vld [vmem:[#allocation7 + $0x730] sm:$0xff]
        %v1262 = vld [vmem:[#allocation7 + $0x738] sm:$0xff]
        %v1263 = vld [vmem:[#allocation7 + $0x740] sm:$0xff]
        %v1264 = vld [vmem:[#allocation7 + $0x748] sm:$0xff]
        %v1265 = vld [vmem:[#allocation7 + $0x750] sm:$0xff]
        %v1266 = vld [vmem:[#allocation7 + $0x758] sm:$0xff]
        %v1267 = vld [vmem:[#allocation7 + $0x760] sm:$0xff]
        %v1268 = vld [vmem:[#allocation7 + $0x768] sm:$0xff]
        %v1269 = vld [vmem:[#allocation7 + $0x770] sm:$0xff]
        %v1270 = vld [vmem:[#allocation7 + $0x778] sm:$0xff]
        %v1271 = vld [vmem:[#allocation7 + $0x780] sm:$0xff]
        %v1272 = vld [vmem:[#allocation7 + $0x788] sm:$0xff]
        %v1273 = vld [vmem:[#allocation7 + $0x790] sm:$0xff]
        %v1274 = vld [vmem:[#allocation7 + $0x798] sm:$0xff]
        %v1275 = vld [vmem:[#allocation7 + $0x7a0] sm:$0xff]
        %v1276 = vld [vmem:[#allocation7 + $0x7a8] sm:$0xff]
        %v1277 = vld [vmem:[#allocation7 + $0x7b0] sm:$0xff]
        %v1278 = vld [vmem:[#allocation7 + $0x7b8] sm:$0xff]
        %v1279 = vld [vmem:[#allocation7 + $0x7c0] sm:$0xff]
        %v1280 = vld [vmem:[#allocation7 + $0x7c8] sm:$0xff]
        %v1281 = vld [vmem:[#allocation7 + $0x7d0] sm:$0xff]
        %v1282 = vld [vmem:[#allocation7 + $0x7d8] sm:$0xff]
        %v1283 = vld [vmem:[#allocation7 + $0x7e0] sm:$0xff]
        %v1284 = vld [vmem:[#allocation7 + $0x7e8] sm:$0xff]
        %v1285 = vld [vmem:[#allocation7 + $0x7f0] sm:$0xff]
        %v1286 = vld [vmem:[#allocation7 + $0x7f8] sm:$0xff]
        %v1289 = vlaneseq
        %v1290 = vshrl.u32 %v1289, 7
        %v1291 = vsub.s32 0, %v1290
        %v1292 = vrot.slane %v369, %v1291
        %v1293 = vlaneseq
        %v1294 = vshrl.u32 %v1293, 7
        %v1295 = vsub.s32 4, %v1294
        %v1296 = vrot.slane %v369, %v1295
        %v1297 = vlaneseq
        %v1298 = vshrl.u32 %v1297, 7
        %v1299 = vsub.s32 0, %v1298
        %v1300 = vrot.slane %v370, %v1299
        %v1301 = vlaneseq
        %v1302 = vshrl.u32 %v1301, 7
        %v1303 = vsub.s32 4, %v1302
        %v1304 = vrot.slane %v370, %v1303
        %v1309 = vlaneseq
        %v1310 = vshrl.u32 %v1309, 7
        %v1311 = vsub.s32 0, %v1310
        %v1312 = vrot.slane %v1292, %v1311
        %v1313 = vlaneseq
        %v1314 = vshrl.u32 %v1313, 7
        %v1315 = vsub.s32 0, %v1314
        %v1316 = vrot.slane %v1296, %v1315
        %v1317 = vlaneseq
        %v1318 = vshrl.u32 %v1317, 7
        %v1319 = vsub.s32 0, %v1318
        %v1320 = vrot.slane %v1300, %v1319
        %v1321 = vlaneseq
        %v1322 = vshrl.u32 %v1321, 7
        %v1323 = vsub.s32 0, %v1322
        %v1324 = vrot.slane %v1304, %v1323
        %v1581 = vunpack.c.l.b16 %v1031
        %v1582 = vunpack.c.h.b16 %v1031
        %v1583 = vunpack.c.l.b16 %v1032
        %v1584 = vunpack.c.h.b16 %v1032
        %v1585 = vunpack.c.l.b16 %v1033
        %v1586 = vunpack.c.h.b16 %v1033
        %v1587 = vunpack.c.l.b16 %v1034
        %v1588 = vunpack.c.h.b16 %v1034
        %v1589 = vunpack.c.l.b16 %v1035
        %v1590 = vunpack.c.h.b16 %v1035
        %v1591 = vunpack.c.l.b16 %v1036
        %v1592 = vunpack.c.h.b16 %v1036
        %v1593 = vunpack.c.l.b16 %v1037
        %v1594 = vunpack.c.h.b16 %v1037
        %v1595 = vunpack.c.l.b16 %v1038
        %v1596 = vunpack.c.h.b16 %v1038
        %v1597 = vunpack.c.l.b16 %v1039
        %v1598 = vunpack.c.h.b16 %v1039
        %v1599 = vunpack.c.l.b16 %v1040
        %v1600 = vunpack.c.h.b16 %v1040
        %v1601 = vunpack.c.l.b16 %v1041
        %v1602 = vunpack.c.h.b16 %v1041
        %v1603 = vunpack.c.l.b16 %v1042
        %v1604 = vunpack.c.h.b16 %v1042
        %v1605 = vunpack.c.l.b16 %v1043
        %v1606 = vunpack.c.h.b16 %v1043
        %v1607 = vunpack.c.l.b16 %v1044
        %v1608 = vunpack.c.h.b16 %v1044
        %v1609 = vunpack.c.l.b16 %v1045
        %v1610 = vunpack.c.h.b16 %v1045
        %v1611 = vunpack.c.l.b16 %v1046
        %v1612 = vunpack.c.h.b16 %v1046
        %v1613 = vunpack.c.l.b16 %v1047
        %v1614 = vunpack.c.h.b16 %v1047
        %v1615 = vunpack.c.l.b16 %v1048
        %v1616 = vunpack.c.h.b16 %v1048
        %v1617 = vunpack.c.l.b16 %v1049
        %v1618 = vunpack.c.h.b16 %v1049
        %v1619 = vunpack.c.l.b16 %v1050
        %v1620 = vunpack.c.h.b16 %v1050
        %v1621 = vunpack.c.l.b16 %v1051
        %v1622 = vunpack.c.h.b16 %v1051
        %v1623 = vunpack.c.l.b16 %v1052
        %v1624 = vunpack.c.h.b16 %v1052
        %v1625 = vunpack.c.l.b16 %v1053
        %v1626 = vunpack.c.h.b16 %v1053
        %v1627 = vunpack.c.l.b16 %v1054
        %v1628 = vunpack.c.h.b16 %v1054
        %v1629 = vunpack.c.l.b16 %v1055
        %v1630 = vunpack.c.h.b16 %v1055
        %v1631 = vunpack.c.l.b16 %v1056
        %v1632 = vunpack.c.h.b16 %v1056
        %v1633 = vunpack.c.l.b16 %v1057
        %v1634 = vunpack.c.h.b16 %v1057
        %v1635 = vunpack.c.l.b16 %v1058
        %v1636 = vunpack.c.h.b16 %v1058
        %v1637 = vunpack.c.l.b16 %v1059
        %v1638 = vunpack.c.h.b16 %v1059
        %v1639 = vunpack.c.l.b16 %v1060
        %v1640 = vunpack.c.h.b16 %v1060
        %v1641 = vunpack.c.l.b16 %v1061
        %v1642 = vunpack.c.h.b16 %v1061
        %v1643 = vunpack.c.l.b16 %v1062
        %v1644 = vunpack.c.h.b16 %v1062
        %v1645 = vunpack.c.l.b16 %v1063
        %v1646 = vunpack.c.h.b16 %v1063
        %v1647 = vunpack.c.l.b16 %v1064
        %v1648 = vunpack.c.h.b16 %v1064
        %v1649 = vunpack.c.l.b16 %v1065
        %v1650 = vunpack.c.h.b16 %v1065
        %v1651 = vunpack.c.l.b16 %v1066
        %v1652 = vunpack.c.h.b16 %v1066
        %v1653 = vunpack.c.l.b16 %v1067
        %v1654 = vunpack.c.h.b16 %v1067
        %v1655 = vunpack.c.l.b16 %v1068
        %v1656 = vunpack.c.h.b16 %v1068
        %v1657 = vunpack.c.l.b16 %v1069
        %v1658 = vunpack.c.h.b16 %v1069
        %v1659 = vunpack.c.l.b16 %v1070
        %v1660 = vunpack.c.h.b16 %v1070
        %v1661 = vunpack.c.l.b16 %v1071
        %v1662 = vunpack.c.h.b16 %v1071
        %v1663 = vunpack.c.l.b16 %v1072
        %v1664 = vunpack.c.h.b16 %v1072
        %v1665 = vunpack.c.l.b16 %v1073
        %v1666 = vunpack.c.h.b16 %v1073
        %v1667 = vunpack.c.l.b16 %v1074
        %v1668 = vunpack.c.h.b16 %v1074
        %v1669 = vunpack.c.l.b16 %v1075
        %v1670 = vunpack.c.h.b16 %v1075
        %v1671 = vunpack.c.l.b16 %v1076
        %v1672 = vunpack.c.h.b16 %v1076
        %v1673 = vunpack.c.l.b16 %v1077
        %v1674 = vunpack.c.h.b16 %v1077
        %v1675 = vunpack.c.l.b16 %v1078
        %v1676 = vunpack.c.h.b16 %v1078
        %v1677 = vunpack.c.l.b16 %v1079
        %v1678 = vunpack.c.h.b16 %v1079
        %v1679 = vunpack.c.l.b16 %v1080
        %v1680 = vunpack.c.h.b16 %v1080
        %v1681 = vunpack.c.l.b16 %v1081
        %v1682 = vunpack.c.h.b16 %v1081
        %v1683 = vunpack.c.l.b16 %v1082
        %v1684 = vunpack.c.h.b16 %v1082
        %v1685 = vunpack.c.l.b16 %v1083
        %v1686 = vunpack.c.h.b16 %v1083
        %v1687 = vunpack.c.l.b16 %v1084
        %v1688 = vunpack.c.h.b16 %v1084
        %v1689 = vunpack.c.l.b16 %v1085
        %v1690 = vunpack.c.h.b16 %v1085
        %v1691 = vunpack.c.l.b16 %v1086
        %v1692 = vunpack.c.h.b16 %v1086
        %v1693 = vunpack.c.l.b16 %v1087
        %v1694 = vunpack.c.h.b16 %v1087
        %v1695 = vunpack.c.l.b16 %v1088
        %v1696 = vunpack.c.h.b16 %v1088
        %v1697 = vunpack.c.l.b16 %v1089
        %v1698 = vunpack.c.h.b16 %v1089
        %v1699 = vunpack.c.l.b16 %v1090
        %v1700 = vunpack.c.h.b16 %v1090
        %v1701 = vunpack.c.l.b16 %v1091
        %v1702 = vunpack.c.h.b16 %v1091
        %v1703 = vunpack.c.l.b16 %v1092
        %v1704 = vunpack.c.h.b16 %v1092
        %v1705 = vunpack.c.l.b16 %v1093
        %v1706 = vunpack.c.h.b16 %v1093
        %v1707 = vunpack.c.l.b16 %v1094
        %v1708 = vunpack.c.h.b16 %v1094
        %v1709 = vunpack.c.l.b16 %v1095
        %v1710 = vunpack.c.h.b16 %v1095
        %v1711 = vunpack.c.l.b16 %v1096
        %v1712 = vunpack.c.h.b16 %v1096
        %v1713 = vunpack.c.l.b16 %v1097
        %v1714 = vunpack.c.h.b16 %v1097
        %v1715 = vunpack.c.l.b16 %v1098
        %v1716 = vunpack.c.h.b16 %v1098
        %v1717 = vunpack.c.l.b16 %v1099
        %v1718 = vunpack.c.h.b16 %v1099
        %v1719 = vunpack.c.l.b16 %v1100
        %v1720 = vunpack.c.h.b16 %v1100
        %v1721 = vunpack.c.l.b16 %v1101
        %v1722 = vunpack.c.h.b16 %v1101
        %v1723 = vunpack.c.l.b16 %v1102
        %v1724 = vunpack.c.h.b16 %v1102
        %v1725 = vunpack.c.l.b16 %v1103
        %v1726 = vunpack.c.h.b16 %v1103
        %v1727 = vunpack.c.l.b16 %v1104
        %v1728 = vunpack.c.h.b16 %v1104
        %v1729 = vunpack.c.l.b16 %v1105
        %v1730 = vunpack.c.h.b16 %v1105
        %v1731 = vunpack.c.l.b16 %v1106
        %v1732 = vunpack.c.h.b16 %v1106
        %v1733 = vunpack.c.l.b16 %v1107
        %v1734 = vunpack.c.h.b16 %v1107
        %v1735 = vunpack.c.l.b16 %v1108
        %v1736 = vunpack.c.h.b16 %v1108
        %v1737 = vunpack.c.l.b16 %v1109
        %v1738 = vunpack.c.h.b16 %v1109
        %v1739 = vunpack.c.l.b16 %v1110
        %v1740 = vunpack.c.h.b16 %v1110
        %v1741 = vunpack.c.l.b16 %v1111
        %v1742 = vunpack.c.h.b16 %v1111
        %v1743 = vunpack.c.l.b16 %v1112
        %v1744 = vunpack.c.h.b16 %v1112
        %v1745 = vunpack.c.l.b16 %v1113
        %v1746 = vunpack.c.h.b16 %v1113
        %v1747 = vunpack.c.l.b16 %v1114
        %v1748 = vunpack.c.h.b16 %v1114
        %v1749 = vunpack.c.l.b16 %v1115
        %v1750 = vunpack.c.h.b16 %v1115
        %v1751 = vunpack.c.l.b16 %v1116
        %v1752 = vunpack.c.h.b16 %v1116
        %v1753 = vunpack.c.l.b16 %v1117
        %v1754 = vunpack.c.h.b16 %v1117
        %v1755 = vunpack.c.l.b16 %v1118
        %v1756 = vunpack.c.h.b16 %v1118
        %v1757 = vunpack.c.l.b16 %v1119
        %v1758 = vunpack.c.h.b16 %v1119
        %v1759 = vunpack.c.l.b16 %v1120
        %v1760 = vunpack.c.h.b16 %v1120
        %v1761 = vunpack.c.l.b16 %v1121
        %v1762 = vunpack.c.h.b16 %v1121
        %v1763 = vunpack.c.l.b16 %v1122
        %v1764 = vunpack.c.h.b16 %v1122
        %v1765 = vunpack.c.l.b16 %v1123
        %v1766 = vunpack.c.h.b16 %v1123
        %v1767 = vunpack.c.l.b16 %v1124
        %v1768 = vunpack.c.h.b16 %v1124
        %v1769 = vunpack.c.l.b16 %v1125
        %v1770 = vunpack.c.h.b16 %v1125
        %v1771 = vunpack.c.l.b16 %v1126
        %v1772 = vunpack.c.h.b16 %v1126
        %v1773 = vunpack.c.l.b16 %v1127
        %v1774 = vunpack.c.h.b16 %v1127
        %v1775 = vunpack.c.l.b16 %v1128
        %v1776 = vunpack.c.h.b16 %v1128
        %v1777 = vunpack.c.l.b16 %v1129
        %v1778 = vunpack.c.h.b16 %v1129
        %v1779 = vunpack.c.l.b16 %v1130
        %v1780 = vunpack.c.h.b16 %v1130
        %v1781 = vunpack.c.l.b16 %v1131
        %v1782 = vunpack.c.h.b16 %v1131
        %v1783 = vunpack.c.l.b16 %v1132
        %v1784 = vunpack.c.h.b16 %v1132
        %v1785 = vunpack.c.l.b16 %v1133
        %v1786 = vunpack.c.h.b16 %v1133
        %v1787 = vunpack.c.l.b16 %v1134
        %v1788 = vunpack.c.h.b16 %v1134
        %v1789 = vunpack.c.l.b16 %v1135
        %v1790 = vunpack.c.h.b16 %v1135
        %v1791 = vunpack.c.l.b16 %v1136
        %v1792 = vunpack.c.h.b16 %v1136
        %v1793 = vunpack.c.l.b16 %v1137
        %v1794 = vunpack.c.h.b16 %v1137
        %v1795 = vunpack.c.l.b16 %v1138
        %v1796 = vunpack.c.h.b16 %v1138
        %v1797 = vunpack.c.l.b16 %v1139
        %v1798 = vunpack.c.h.b16 %v1139
        %v1799 = vunpack.c.l.b16 %v1140
        %v1800 = vunpack.c.h.b16 %v1140
        %v1801 = vunpack.c.l.b16 %v1141
        %v1802 = vunpack.c.h.b16 %v1141
        %v1803 = vunpack.c.l.b16 %v1142
        %v1804 = vunpack.c.h.b16 %v1142
        %v1805 = vunpack.c.l.b16 %v1143
        %v1806 = vunpack.c.h.b16 %v1143
        %v1807 = vunpack.c.l.b16 %v1144
        %v1808 = vunpack.c.h.b16 %v1144
        %v1809 = vunpack.c.l.b16 %v1145
        %v1810 = vunpack.c.h.b16 %v1145
        %v1811 = vunpack.c.l.b16 %v1146
        %v1812 = vunpack.c.h.b16 %v1146
        %v1813 = vunpack.c.l.b16 %v1147
        %v1814 = vunpack.c.h.b16 %v1147
        %v1815 = vunpack.c.l.b16 %v1148
        %v1816 = vunpack.c.h.b16 %v1148
        %v1817 = vunpack.c.l.b16 %v1149
        %v1818 = vunpack.c.h.b16 %v1149
        %v1819 = vunpack.c.l.b16 %v1150
        %v1820 = vunpack.c.h.b16 %v1150
        %v1821 = vunpack.c.l.b16 %v1151
        %v1822 = vunpack.c.h.b16 %v1151
        %v1823 = vunpack.c.l.b16 %v1152
        %v1824 = vunpack.c.h.b16 %v1152
        %v1825 = vunpack.c.l.b16 %v1153
        %v1826 = vunpack.c.h.b16 %v1153
        %v1827 = vunpack.c.l.b16 %v1154
        %v1828 = vunpack.c.h.b16 %v1154
        %v1829 = vunpack.c.l.b16 %v1155
        %v1830 = vunpack.c.h.b16 %v1155
        %v1831 = vunpack.c.l.b16 %v1156
        %v1832 = vunpack.c.h.b16 %v1156
        %v1833 = vunpack.c.l.b16 %v1157
        %v1834 = vunpack.c.h.b16 %v1157
        %v1835 = vunpack.c.l.b16 %v1158
        %v1836 = vunpack.c.h.b16 %v1158
        %v1837 = vunpack.c.l.b16 %v1159
        %v1838 = vunpack.c.h.b16 %v1159
        %v1839 = vunpack.c.l.b16 %v1160
        %v1840 = vunpack.c.h.b16 %v1160
        %v1841 = vunpack.c.l.b16 %v1161
        %v1842 = vunpack.c.h.b16 %v1161
        %v1843 = vunpack.c.l.b16 %v1162
        %v1844 = vunpack.c.h.b16 %v1162
        %v1845 = vunpack.c.l.b16 %v1163
        %v1846 = vunpack.c.h.b16 %v1163
        %v1847 = vunpack.c.l.b16 %v1164
        %v1848 = vunpack.c.h.b16 %v1164
        %v1849 = vunpack.c.l.b16 %v1165
        %v1850 = vunpack.c.h.b16 %v1165
        %v1851 = vunpack.c.l.b16 %v1166
        %v1852 = vunpack.c.h.b16 %v1166
        %v1853 = vunpack.c.l.b16 %v1167
        %v1854 = vunpack.c.h.b16 %v1167
        %v1855 = vunpack.c.l.b16 %v1168
        %v1856 = vunpack.c.h.b16 %v1168
        %v1857 = vunpack.c.l.b16 %v1169
        %v1858 = vunpack.c.h.b16 %v1169
        %v1859 = vunpack.c.l.b16 %v1170
        %v1860 = vunpack.c.h.b16 %v1170
        %v1861 = vunpack.c.l.b16 %v1171
        %v1862 = vunpack.c.h.b16 %v1171
        %v1863 = vunpack.c.l.b16 %v1172
        %v1864 = vunpack.c.h.b16 %v1172
        %v1865 = vunpack.c.l.b16 %v1173
        %v1866 = vunpack.c.h.b16 %v1173
        %v1867 = vunpack.c.l.b16 %v1174
        %v1868 = vunpack.c.h.b16 %v1174
        %v1869 = vunpack.c.l.b16 %v1175
        %v1870 = vunpack.c.h.b16 %v1175
        %v1871 = vunpack.c.l.b16 %v1176
        %v1872 = vunpack.c.h.b16 %v1176
        %v1873 = vunpack.c.l.b16 %v1177
        %v1874 = vunpack.c.h.b16 %v1177
        %v1875 = vunpack.c.l.b16 %v1178
        %v1876 = vunpack.c.h.b16 %v1178
        %v1877 = vunpack.c.l.b16 %v1179
        %v1878 = vunpack.c.h.b16 %v1179
        %v1879 = vunpack.c.l.b16 %v1180
        %v1880 = vunpack.c.h.b16 %v1180
        %v1881 = vunpack.c.l.b16 %v1181
        %v1882 = vunpack.c.h.b16 %v1181
        %v1883 = vunpack.c.l.b16 %v1182
        %v1884 = vunpack.c.h.b16 %v1182
        %v1885 = vunpack.c.l.b16 %v1183
        %v1886 = vunpack.c.h.b16 %v1183
        %v1887 = vunpack.c.l.b16 %v1184
        %v1888 = vunpack.c.h.b16 %v1184
        %v1889 = vunpack.c.l.b16 %v1185
        %v1890 = vunpack.c.h.b16 %v1185
        %v1891 = vunpack.c.l.b16 %v1186
        %v1892 = vunpack.c.h.b16 %v1186
        %v1893 = vunpack.c.l.b16 %v1187
        %v1894 = vunpack.c.h.b16 %v1187
        %v1895 = vunpack.c.l.b16 %v1188
        %v1896 = vunpack.c.h.b16 %v1188
        %v1897 = vunpack.c.l.b16 %v1189
        %v1898 = vunpack.c.h.b16 %v1189
        %v1899 = vunpack.c.l.b16 %v1190
        %v1900 = vunpack.c.h.b16 %v1190
        %v1901 = vunpack.c.l.b16 %v1191
        %v1902 = vunpack.c.h.b16 %v1191
        %v1903 = vunpack.c.l.b16 %v1192
        %v1904 = vunpack.c.h.b16 %v1192
        %v1905 = vunpack.c.l.b16 %v1193
        %v1906 = vunpack.c.h.b16 %v1193
        %v1907 = vunpack.c.l.b16 %v1194
        %v1908 = vunpack.c.h.b16 %v1194
        %v1909 = vunpack.c.l.b16 %v1195
        %v1910 = vunpack.c.h.b16 %v1195
        %v1911 = vunpack.c.l.b16 %v1196
        %v1912 = vunpack.c.h.b16 %v1196
        %v1913 = vunpack.c.l.b16 %v1197
        %v1914 = vunpack.c.h.b16 %v1197
        %v1915 = vunpack.c.l.b16 %v1198
        %v1916 = vunpack.c.h.b16 %v1198
        %v1917 = vunpack.c.l.b16 %v1199
        %v1918 = vunpack.c.h.b16 %v1199
        %v1919 = vunpack.c.l.b16 %v1200
        %v1920 = vunpack.c.h.b16 %v1200
        %v1921 = vunpack.c.l.b16 %v1201
        %v1922 = vunpack.c.h.b16 %v1201
        %v1923 = vunpack.c.l.b16 %v1202
        %v1924 = vunpack.c.h.b16 %v1202
        %v1925 = vunpack.c.l.b16 %v1203
        %v1926 = vunpack.c.h.b16 %v1203
        %v1927 = vunpack.c.l.b16 %v1204
        %v1928 = vunpack.c.h.b16 %v1204
        %v1929 = vunpack.c.l.b16 %v1205
        %v1930 = vunpack.c.h.b16 %v1205
        %v1931 = vunpack.c.l.b16 %v1206
        %v1932 = vunpack.c.h.b16 %v1206
        %v1933 = vunpack.c.l.b16 %v1207
        %v1934 = vunpack.c.h.b16 %v1207
        %v1935 = vunpack.c.l.b16 %v1208
        %v1936 = vunpack.c.h.b16 %v1208
        %v1937 = vunpack.c.l.b16 %v1209
        %v1938 = vunpack.c.h.b16 %v1209
        %v1939 = vunpack.c.l.b16 %v1210
        %v1940 = vunpack.c.h.b16 %v1210
        %v1941 = vunpack.c.l.b16 %v1211
        %v1942 = vunpack.c.h.b16 %v1211
        %v1943 = vunpack.c.l.b16 %v1212
        %v1944 = vunpack.c.h.b16 %v1212
        %v1945 = vunpack.c.l.b16 %v1213
        %v1946 = vunpack.c.h.b16 %v1213
        %v1947 = vunpack.c.l.b16 %v1214
        %v1948 = vunpack.c.h.b16 %v1214
        %v1949 = vunpack.c.l.b16 %v1215
        %v1950 = vunpack.c.h.b16 %v1215
        %v1951 = vunpack.c.l.b16 %v1216
        %v1952 = vunpack.c.h.b16 %v1216
        %v1953 = vunpack.c.l.b16 %v1217
        %v1954 = vunpack.c.h.b16 %v1217
        %v1955 = vunpack.c.l.b16 %v1218
        %v1956 = vunpack.c.h.b16 %v1218
        %v1957 = vunpack.c.l.b16 %v1219
        %v1958 = vunpack.c.h.b16 %v1219
        %v1959 = vunpack.c.l.b16 %v1220
        %v1960 = vunpack.c.h.b16 %v1220
        %v1961 = vunpack.c.l.b16 %v1221
        %v1962 = vunpack.c.h.b16 %v1221
        %v1963 = vunpack.c.l.b16 %v1222
        %v1964 = vunpack.c.h.b16 %v1222
        %v1965 = vunpack.c.l.b16 %v1223
        %v1966 = vunpack.c.h.b16 %v1223
        %v1967 = vunpack.c.l.b16 %v1224
        %v1968 = vunpack.c.h.b16 %v1224
        %v1969 = vunpack.c.l.b16 %v1225
        %v1970 = vunpack.c.h.b16 %v1225
        %v1971 = vunpack.c.l.b16 %v1226
        %v1972 = vunpack.c.h.b16 %v1226
        %v1973 = vunpack.c.l.b16 %v1227
        %v1974 = vunpack.c.h.b16 %v1227
        %v1975 = vunpack.c.l.b16 %v1228
        %v1976 = vunpack.c.h.b16 %v1228
        %v1977 = vunpack.c.l.b16 %v1229
        %v1978 = vunpack.c.h.b16 %v1229
        %v1979 = vunpack.c.l.b16 %v1230
        %v1980 = vunpack.c.h.b16 %v1230
        %v1981 = vunpack.c.l.b16 %v1231
        %v1982 = vunpack.c.h.b16 %v1231
        %v1983 = vunpack.c.l.b16 %v1232
        %v1984 = vunpack.c.h.b16 %v1232
        %v1985 = vunpack.c.l.b16 %v1233
        %v1986 = vunpack.c.h.b16 %v1233
        %v1987 = vunpack.c.l.b16 %v1234
        %v1988 = vunpack.c.h.b16 %v1234
        %v1989 = vunpack.c.l.b16 %v1235
        %v1990 = vunpack.c.h.b16 %v1235
        %v1991 = vunpack.c.l.b16 %v1236
        %v1992 = vunpack.c.h.b16 %v1236
        %v1993 = vunpack.c.l.b16 %v1237
        %v1994 = vunpack.c.h.b16 %v1237
        %v1995 = vunpack.c.l.b16 %v1238
        %v1996 = vunpack.c.h.b16 %v1238
        %v1997 = vunpack.c.l.b16 %v1239
        %v1998 = vunpack.c.h.b16 %v1239
        %v1999 = vunpack.c.l.b16 %v1240
        %v2000 = vunpack.c.h.b16 %v1240
        %v2001 = vunpack.c.l.b16 %v1241
        %v2002 = vunpack.c.h.b16 %v1241
        %v2003 = vunpack.c.l.b16 %v1242
        %v2004 = vunpack.c.h.b16 %v1242
        %v2005 = vunpack.c.l.b16 %v1243
        %v2006 = vunpack.c.h.b16 %v1243
        %v2007 = vunpack.c.l.b16 %v1244
        %v2008 = vunpack.c.h.b16 %v1244
        %v2009 = vunpack.c.l.b16 %v1245
        %v2010 = vunpack.c.h.b16 %v1245
        %v2011 = vunpack.c.l.b16 %v1246
        %v2012 = vunpack.c.h.b16 %v1246
        %v2013 = vunpack.c.l.b16 %v1247
        %v2014 = vunpack.c.h.b16 %v1247
        %v2015 = vunpack.c.l.b16 %v1248
        %v2016 = vunpack.c.h.b16 %v1248
        %v2017 = vunpack.c.l.b16 %v1249
        %v2018 = vunpack.c.h.b16 %v1249
        %v2019 = vunpack.c.l.b16 %v1250
        %v2020 = vunpack.c.h.b16 %v1250
        %v2021 = vunpack.c.l.b16 %v1251
        %v2022 = vunpack.c.h.b16 %v1251
        %v2023 = vunpack.c.l.b16 %v1252
        %v2024 = vunpack.c.h.b16 %v1252
        %v2025 = vunpack.c.l.b16 %v1253
        %v2026 = vunpack.c.h.b16 %v1253
        %v2027 = vunpack.c.l.b16 %v1254
        %v2028 = vunpack.c.h.b16 %v1254
        %v2029 = vunpack.c.l.b16 %v1255
        %v2030 = vunpack.c.h.b16 %v1255
        %v2031 = vunpack.c.l.b16 %v1256
        %v2032 = vunpack.c.h.b16 %v1256
        %v2033 = vunpack.c.l.b16 %v1257
        %v2034 = vunpack.c.h.b16 %v1257
        %v2035 = vunpack.c.l.b16 %v1258
        %v2036 = vunpack.c.h.b16 %v1258
        %v2037 = vunpack.c.l.b16 %v1259
        %v2038 = vunpack.c.h.b16 %v1259
        %v2039 = vunpack.c.l.b16 %v1260
        %v2040 = vunpack.c.h.b16 %v1260
        %v2041 = vunpack.c.l.b16 %v1261
        %v2042 = vunpack.c.h.b16 %v1261
        %v2043 = vunpack.c.l.b16 %v1262
        %v2044 = vunpack.c.h.b16 %v1262
        %v2045 = vunpack.c.l.b16 %v1263
        %v2046 = vunpack.c.h.b16 %v1263
        %v2047 = vunpack.c.l.b16 %v1264
        %v2048 = vunpack.c.h.b16 %v1264
        %v2049 = vunpack.c.l.b16 %v1265
        %v2050 = vunpack.c.h.b16 %v1265
        %v2051 = vunpack.c.l.b16 %v1266
        %v2052 = vunpack.c.h.b16 %v1266
        %v2053 = vunpack.c.l.b16 %v1267
        %v2054 = vunpack.c.h.b16 %v1267
        %v2055 = vunpack.c.l.b16 %v1268
        %v2056 = vunpack.c.h.b16 %v1268
        %v2057 = vunpack.c.l.b16 %v1269
        %v2058 = vunpack.c.h.b16 %v1269
        %v2059 = vunpack.c.l.b16 %v1270
        %v2060 = vunpack.c.h.b16 %v1270
        %v2061 = vunpack.c.l.b16 %v1271
        %v2062 = vunpack.c.h.b16 %v1271
        %v2063 = vunpack.c.l.b16 %v1272
        %v2064 = vunpack.c.h.b16 %v1272
        %v2065 = vunpack.c.l.b16 %v1273
        %v2066 = vunpack.c.h.b16 %v1273
        %v2067 = vunpack.c.l.b16 %v1274
        %v2068 = vunpack.c.h.b16 %v1274
        %v2069 = vunpack.c.l.b16 %v1275
        %v2070 = vunpack.c.h.b16 %v1275
        %v2071 = vunpack.c.l.b16 %v1276
        %v2072 = vunpack.c.h.b16 %v1276
        %v2073 = vunpack.c.l.b16 %v1277
        %v2074 = vunpack.c.h.b16 %v1277
        %v2075 = vunpack.c.l.b16 %v1278
        %v2076 = vunpack.c.h.b16 %v1278
        %v2077 = vunpack.c.l.b16 %v1279
        %v2078 = vunpack.c.h.b16 %v1279
        %v2079 = vunpack.c.l.b16 %v1280
        %v2080 = vunpack.c.h.b16 %v1280
        %v2081 = vunpack.c.l.b16 %v1281
        %v2082 = vunpack.c.h.b16 %v1281
        %v2083 = vunpack.c.l.b16 %v1282
        %v2084 = vunpack.c.h.b16 %v1282
        %v2085 = vunpack.c.l.b16 %v1283
        %v2086 = vunpack.c.h.b16 %v1283
        %v2087 = vunpack.c.l.b16 %v1284
        %v2088 = vunpack.c.h.b16 %v1284
        %v2089 = vunpack.c.l.b16 %v1285
        %v2090 = vunpack.c.h.b16 %v1285
        %v2091 = vunpack.c.l.b16 %v1286
        %v2092 = vunpack.c.h.b16 %v1286
        %v2093 = vpack.c.b16 %v1585, %v1581
        %v2094 = vpack.c.b16 %v1586, %v1582
        %v2095 = vpack.c.b16 %v1587, %v1583
        %v2096 = vpack.c.b16 %v1588, %v1584
        %v2097 = vpack.c.b16 %v1593, %v1589
        %v2098 = vpack.c.b16 %v1594, %v1590
        %v2099 = vpack.c.b16 %v1595, %v1591
        %v2100 = vpack.c.b16 %v1596, %v1592
        %v2101 = vpack.c.b16 %v1601, %v1597
        %v2102 = vpack.c.b16 %v1602, %v1598
        %v2103 = vpack.c.b16 %v1603, %v1599
        %v2104 = vpack.c.b16 %v1604, %v1600
        %v2105 = vpack.c.b16 %v1609, %v1605
        %v2106 = vpack.c.b16 %v1610, %v1606
        %v2107 = vpack.c.b16 %v1611, %v1607
        %v2108 = vpack.c.b16 %v1612, %v1608
        %v2109 = vpack.c.b16 %v1617, %v1613
        %v2110 = vpack.c.b16 %v1618, %v1614
        %v2111 = vpack.c.b16 %v1619, %v1615
        %v2112 = vpack.c.b16 %v1620, %v1616
        %v2113 = vpack.c.b16 %v1625, %v1621
        %v2114 = vpack.c.b16 %v1626, %v1622
        %v2115 = vpack.c.b16 %v1627, %v1623
        %v2116 = vpack.c.b16 %v1628, %v1624
        %v2117 = vpack.c.b16 %v1633, %v1629
        %v2118 = vpack.c.b16 %v1634, %v1630
        %v2119 = vpack.c.b16 %v1635, %v1631
        %v2120 = vpack.c.b16 %v1636, %v1632
        %v2121 = vpack.c.b16 %v1641, %v1637
        %v2122 = vpack.c.b16 %v1642, %v1638
        %v2123 = vpack.c.b16 %v1643, %v1639
        %v2124 = vpack.c.b16 %v1644, %v1640
        %v2125 = vpack.c.b16 %v1649, %v1645
        %v2126 = vpack.c.b16 %v1650, %v1646
        %v2127 = vpack.c.b16 %v1651, %v1647
        %v2128 = vpack.c.b16 %v1652, %v1648
        %v2129 = vpack.c.b16 %v1657, %v1653
        %v2130 = vpack.c.b16 %v1658, %v1654
        %v2131 = vpack.c.b16 %v1659, %v1655
        %v2132 = vpack.c.b16 %v1660, %v1656
        %v2133 = vpack.c.b16 %v1665, %v1661
        %v2134 = vpack.c.b16 %v1666, %v1662
        %v2135 = vpack.c.b16 %v1667, %v1663
        %v2136 = vpack.c.b16 %v1668, %v1664
        %v2137 = vpack.c.b16 %v1673, %v1669
        %v2138 = vpack.c.b16 %v1674, %v1670
        %v2139 = vpack.c.b16 %v1675, %v1671
        %v2140 = vpack.c.b16 %v1676, %v1672
        %v2141 = vpack.c.b16 %v1681, %v1677
        %v2142 = vpack.c.b16 %v1682, %v1678
        %v2143 = vpack.c.b16 %v1683, %v1679
        %v2144 = vpack.c.b16 %v1684, %v1680
        %v2145 = vpack.c.b16 %v1689, %v1685
        %v2146 = vpack.c.b16 %v1690, %v1686
        %v2147 = vpack.c.b16 %v1691, %v1687
        %v2148 = vpack.c.b16 %v1692, %v1688
        %v2149 = vpack.c.b16 %v1697, %v1693
        %v2150 = vpack.c.b16 %v1698, %v1694
        %v2151 = vpack.c.b16 %v1699, %v1695
        %v2152 = vpack.c.b16 %v1700, %v1696
        %v2153 = vpack.c.b16 %v1705, %v1701
        %v2154 = vpack.c.b16 %v1706, %v1702
        %v2155 = vpack.c.b16 %v1707, %v1703
        %v2156 = vpack.c.b16 %v1708, %v1704
        %v2157 = vpack.c.b16 %v1713, %v1709
        %v2158 = vpack.c.b16 %v1714, %v1710
        %v2159 = vpack.c.b16 %v1715, %v1711
        %v2160 = vpack.c.b16 %v1716, %v1712
        %v2161 = vpack.c.b16 %v1721, %v1717
        %v2162 = vpack.c.b16 %v1722, %v1718
        %v2163 = vpack.c.b16 %v1723, %v1719
        %v2164 = vpack.c.b16 %v1724, %v1720
        %v2165 = vpack.c.b16 %v1729, %v1725
        %v2166 = vpack.c.b16 %v1730, %v1726
        %v2167 = vpack.c.b16 %v1731, %v1727
        %v2168 = vpack.c.b16 %v1732, %v1728
        %v2169 = vpack.c.b16 %v1737, %v1733
        %v2170 = vpack.c.b16 %v1738, %v1734
        %v2171 = vpack.c.b16 %v1739, %v1735
        %v2172 = vpack.c.b16 %v1740, %v1736
        %v2173 = vpack.c.b16 %v1745, %v1741
        %v2174 = vpack.c.b16 %v1746, %v1742
        %v2175 = vpack.c.b16 %v1747, %v1743
        %v2176 = vpack.c.b16 %v1748, %v1744
        %v2177 = vpack.c.b16 %v1753, %v1749
        %v2178 = vpack.c.b16 %v1754, %v1750
        %v2179 = vpack.c.b16 %v1755, %v1751
        %v2180 = vpack.c.b16 %v1756, %v1752
        %v2181 = vpack.c.b16 %v1761, %v1757
        %v2182 = vpack.c.b16 %v1762, %v1758
        %v2183 = vpack.c.b16 %v1763, %v1759
        %v2184 = vpack.c.b16 %v1764, %v1760
        %v2185 = vpack.c.b16 %v1769, %v1765
        %v2186 = vpack.c.b16 %v1770, %v1766
        %v2187 = vpack.c.b16 %v1771, %v1767
        %v2188 = vpack.c.b16 %v1772, %v1768
        %v2189 = vpack.c.b16 %v1777, %v1773
        %v2190 = vpack.c.b16 %v1778, %v1774
        %v2191 = vpack.c.b16 %v1779, %v1775
        %v2192 = vpack.c.b16 %v1780, %v1776
        %v2193 = vpack.c.b16 %v1785, %v1781
        %v2194 = vpack.c.b16 %v1786, %v1782
        %v2195 = vpack.c.b16 %v1787, %v1783
        %v2196 = vpack.c.b16 %v1788, %v1784
        %v2197 = vpack.c.b16 %v1793, %v1789
        %v2198 = vpack.c.b16 %v1794, %v1790
        %v2199 = vpack.c.b16 %v1795, %v1791
        %v2200 = vpack.c.b16 %v1796, %v1792
        %v2201 = vpack.c.b16 %v1801, %v1797
        %v2202 = vpack.c.b16 %v1802, %v1798
        %v2203 = vpack.c.b16 %v1803, %v1799
        %v2204 = vpack.c.b16 %v1804, %v1800
        %v2205 = vpack.c.b16 %v1809, %v1805
        %v2206 = vpack.c.b16 %v1810, %v1806
        %v2207 = vpack.c.b16 %v1811, %v1807
        %v2208 = vpack.c.b16 %v1812, %v1808
        %v2209 = vpack.c.b16 %v1817, %v1813
        %v2210 = vpack.c.b16 %v1818, %v1814
        %v2211 = vpack.c.b16 %v1819, %v1815
        %v2212 = vpack.c.b16 %v1820, %v1816
        %v2213 = vpack.c.b16 %v1825, %v1821
        %v2214 = vpack.c.b16 %v1826, %v1822
        %v2215 = vpack.c.b16 %v1827, %v1823
        %v2216 = vpack.c.b16 %v1828, %v1824
        %v2217 = vpack.c.b16 %v1833, %v1829
        %v2218 = vpack.c.b16 %v1834, %v1830
        %v2219 = vpack.c.b16 %v1835, %v1831
        %v2220 = vpack.c.b16 %v1836, %v1832
        %v2221 = vpack.c.b16 %v1841, %v1837
        %v2222 = vpack.c.b16 %v1842, %v1838
        %v2223 = vpack.c.b16 %v1843, %v1839
        %v2224 = vpack.c.b16 %v1844, %v1840
        %v2225 = vpack.c.b16 %v1849, %v1845
        %v2226 = vpack.c.b16 %v1850, %v1846
        %v2227 = vpack.c.b16 %v1851, %v1847
        %v2228 = vpack.c.b16 %v1852, %v1848
        %v2229 = vpack.c.b16 %v1857, %v1853
        %v2230 = vpack.c.b16 %v1858, %v1854
        %v2231 = vpack.c.b16 %v1859, %v1855
        %v2232 = vpack.c.b16 %v1860, %v1856
        %v2233 = vpack.c.b16 %v1865, %v1861
        %v2234 = vpack.c.b16 %v1866, %v1862
        %v2235 = vpack.c.b16 %v1867, %v1863
        %v2236 = vpack.c.b16 %v1868, %v1864
        %v2237 = vpack.c.b16 %v1873, %v1869
        %v2238 = vpack.c.b16 %v1874, %v1870
        %v2239 = vpack.c.b16 %v1875, %v1871
        %v2240 = vpack.c.b16 %v1876, %v1872
        %v2241 = vpack.c.b16 %v1881, %v1877
        %v2242 = vpack.c.b16 %v1882, %v1878
        %v2243 = vpack.c.b16 %v1883, %v1879
        %v2244 = vpack.c.b16 %v1884, %v1880
        %v2245 = vpack.c.b16 %v1889, %v1885
        %v2246 = vpack.c.b16 %v1890, %v1886
        %v2247 = vpack.c.b16 %v1891, %v1887
        %v2248 = vpack.c.b16 %v1892, %v1888
        %v2249 = vpack.c.b16 %v1897, %v1893
        %v2250 = vpack.c.b16 %v1898, %v1894
        %v2251 = vpack.c.b16 %v1899, %v1895
        %v2252 = vpack.c.b16 %v1900, %v1896
        %v2253 = vpack.c.b16 %v1905, %v1901
        %v2254 = vpack.c.b16 %v1906, %v1902
        %v2255 = vpack.c.b16 %v1907, %v1903
        %v2256 = vpack.c.b16 %v1908, %v1904
        %v2257 = vpack.c.b16 %v1913, %v1909
        %v2258 = vpack.c.b16 %v1914, %v1910
        %v2259 = vpack.c.b16 %v1915, %v1911
        %v2260 = vpack.c.b16 %v1916, %v1912
        %v2261 = vpack.c.b16 %v1921, %v1917
        %v2262 = vpack.c.b16 %v1922, %v1918
        %v2263 = vpack.c.b16 %v1923, %v1919
        %v2264 = vpack.c.b16 %v1924, %v1920
        %v2265 = vpack.c.b16 %v1929, %v1925
        %v2266 = vpack.c.b16 %v1930, %v1926
        %v2267 = vpack.c.b16 %v1931, %v1927
        %v2268 = vpack.c.b16 %v1932, %v1928
        %v2269 = vpack.c.b16 %v1937, %v1933
        %v2270 = vpack.c.b16 %v1938, %v1934
        %v2271 = vpack.c.b16 %v1939, %v1935
        %v2272 = vpack.c.b16 %v1940, %v1936
        %v2273 = vpack.c.b16 %v1945, %v1941
        %v2274 = vpack.c.b16 %v1946, %v1942
        %v2275 = vpack.c.b16 %v1947, %v1943
        %v2276 = vpack.c.b16 %v1948, %v1944
        %v2277 = vpack.c.b16 %v1953, %v1949
        %v2278 = vpack.c.b16 %v1954, %v1950
        %v2279 = vpack.c.b16 %v1955, %v1951
        %v2280 = vpack.c.b16 %v1956, %v1952
        %v2281 = vpack.c.b16 %v1961, %v1957
        %v2282 = vpack.c.b16 %v1962, %v1958
        %v2283 = vpack.c.b16 %v1963, %v1959
        %v2284 = vpack.c.b16 %v1964, %v1960
        %v2285 = vpack.c.b16 %v1969, %v1965
        %v2286 = vpack.c.b16 %v1970, %v1966
        %v2287 = vpack.c.b16 %v1971, %v1967
        %v2288 = vpack.c.b16 %v1972, %v1968
        %v2289 = vpack.c.b16 %v1977, %v1973
        %v2290 = vpack.c.b16 %v1978, %v1974
        %v2291 = vpack.c.b16 %v1979, %v1975
        %v2292 = vpack.c.b16 %v1980, %v1976
        %v2293 = vpack.c.b16 %v1985, %v1981
        %v2294 = vpack.c.b16 %v1986, %v1982
        %v2295 = vpack.c.b16 %v1987, %v1983
        %v2296 = vpack.c.b16 %v1988, %v1984
        %v2297 = vpack.c.b16 %v1993, %v1989
        %v2298 = vpack.c.b16 %v1994, %v1990
        %v2299 = vpack.c.b16 %v1995, %v1991
        %v2300 = vpack.c.b16 %v1996, %v1992
        %v2301 = vpack.c.b16 %v2001, %v1997
        %v2302 = vpack.c.b16 %v2002, %v1998
        %v2303 = vpack.c.b16 %v2003, %v1999
        %v2304 = vpack.c.b16 %v2004, %v2000
        %v2305 = vpack.c.b16 %v2009, %v2005
        %v2306 = vpack.c.b16 %v2010, %v2006
        %v2307 = vpack.c.b16 %v2011, %v2007
        %v2308 = vpack.c.b16 %v2012, %v2008
        %v2309 = vpack.c.b16 %v2017, %v2013
        %v2310 = vpack.c.b16 %v2018, %v2014
        %v2311 = vpack.c.b16 %v2019, %v2015
        %v2312 = vpack.c.b16 %v2020, %v2016
        %v2313 = vpack.c.b16 %v2025, %v2021
        %v2314 = vpack.c.b16 %v2026, %v2022
        %v2315 = vpack.c.b16 %v2027, %v2023
        %v2316 = vpack.c.b16 %v2028, %v2024
        %v2317 = vpack.c.b16 %v2033, %v2029
        %v2318 = vpack.c.b16 %v2034, %v2030
        %v2319 = vpack.c.b16 %v2035, %v2031
        %v2320 = vpack.c.b16 %v2036, %v2032
        %v2321 = vpack.c.b16 %v2041, %v2037
        %v2322 = vpack.c.b16 %v2042, %v2038
        %v2323 = vpack.c.b16 %v2043, %v2039
        %v2324 = vpack.c.b16 %v2044, %v2040
        %v2325 = vpack.c.b16 %v2049, %v2045
        %v2326 = vpack.c.b16 %v2050, %v2046
        %v2327 = vpack.c.b16 %v2051, %v2047
        %v2328 = vpack.c.b16 %v2052, %v2048
        %v2329 = vpack.c.b16 %v2057, %v2053
        %v2330 = vpack.c.b16 %v2058, %v2054
        %v2331 = vpack.c.b16 %v2059, %v2055
        %v2332 = vpack.c.b16 %v2060, %v2056
        %v2333 = vpack.c.b16 %v2065, %v2061
        %v2334 = vpack.c.b16 %v2066, %v2062
        %v2335 = vpack.c.b16 %v2067, %v2063
        %v2336 = vpack.c.b16 %v2068, %v2064
        %v2337 = vpack.c.b16 %v2073, %v2069
        %v2338 = vpack.c.b16 %v2074, %v2070
        %v2339 = vpack.c.b16 %v2075, %v2071
        %v2340 = vpack.c.b16 %v2076, %v2072
        %v2341 = vpack.c.b16 %v2081, %v2077
        %v2342 = vpack.c.b16 %v2082, %v2078
        %v2343 = vpack.c.b16 %v2083, %v2079
        %v2344 = vpack.c.b16 %v2084, %v2080
        %v2345 = vpack.c.b16 %v2089, %v2085
        %v2346 = vpack.c.b16 %v2090, %v2086
        %v2347 = vpack.c.b16 %v2091, %v2087
        %v2348 = vpack.c.b16 %v2092, %v2088
        %2605 = vmatprep.subr.bf16.mxu0 %v2122
        %2606 = vmatpush1.bf16.msra.mxu0 %v2121
        %2607 = vmatprep.subr.bf16.mxu0 %v2118
        %2608 = vmatpush1.bf16.msra.mxu0 %v2117
        %2609 = vmatprep.subr.bf16.mxu0 %v2114
        %2610 = vmatpush1.bf16.msra.mxu0 %v2113
        %2611 = vmatprep.subr.bf16.mxu0 %v2110
        %2612 = vmatpush1.bf16.msra.mxu0 %v2109
        %2613 = vmatprep.subr.bf16.mxu0 %v2106
        %2614 = vmatpush1.bf16.msra.mxu0 %v2105
        %2615 = vmatprep.subr.bf16.mxu0 %v2102
        %2616 = vmatpush1.bf16.msra.mxu0 %v2101
        %2617 = vmatprep.subr.bf16.mxu0 %v2098
        %2618 = vmatpush1.bf16.msra.mxu0 %v2097
        %2619 = vmatprep.subr.bf16.mxu0 %v2094
        %2620 = vmatpush1.bf16.msra.mxu0 %v2093
        %2621 = vmatprep.subr.bf16.mxu0 %v2154
        %2622 = vmatpush2.bf16.msra.mxu0 %v2153
        %2623 = vmatprep.subr.bf16.mxu0 %v2150
        %2624 = vmatpush2.bf16.msra.mxu0 %v2149
        %2625 = vmatprep.subr.bf16.mxu0 %v2146
        %2626 = vmatpush2.bf16.msra.mxu0 %v2145
        %2627 = vmatprep.subr.bf16.mxu0 %v2142
        %2628 = vmatpush2.bf16.msra.mxu0 %v2141
        %2629 = vmatprep.subr.bf16.mxu0 %v2138
        %2630 = vmatpush2.bf16.msra.mxu0 %v2137
        %2631 = vmatprep.subr.bf16.mxu0 %v2134
        %2632 = vmatpush2.bf16.msra.mxu0 %v2133
        %2633 = vmatprep.subr.bf16.mxu0 %v2130
        %2634 = vmatpush2.bf16.msra.mxu0 %v2129
        %2635 = vmatprep.subr.bf16.mxu0 %v2126
        %2636 = vmatpush2.bf16.msra.mxu0 %v2125
        %2637 = vmatprep.mubr.bf16.mxu0 %v1024
        %2638 = vmatmul.mubr.bf16.gmra.mxu0 %v1023
        %v2639 = vpop.f32.mrf.mxu0
        %v2640 = vadd.f32 %v1312, %v2639
        %v2641 = vpop.f32.mrf.mxu0
        %v2642 = vadd.f32 %v1316, %v2641
        %v2643 = vpop.f32.mrf.mxu0
        %v2644 = vpop.f32.mrf.mxu0
        %2645 = vdwg.mxu0
        %2646 = vmatprep.subr.bf16.mxu0 %v2186
        %2647 = vmatpush1.bf16.msra.mxu0 %v2185
        %2648 = vmatprep.subr.bf16.mxu0 %v2182
        %2649 = vmatpush1.bf16.msra.mxu0 %v2181
        %2650 = vmatprep.subr.bf16.mxu0 %v2178
        %2651 = vmatpush1.bf16.msra.mxu0 %v2177
        %2652 = vmatprep.subr.bf16.mxu0 %v2174
        %2653 = vmatpush1.bf16.msra.mxu0 %v2173
        %2654 = vmatprep.subr.bf16.mxu0 %v2170
        %2655 = vmatpush1.bf16.msra.mxu0 %v2169
        %2656 = vmatprep.subr.bf16.mxu0 %v2166
        %2657 = vmatpush1.bf16.msra.mxu0 %v2165
        %2658 = vmatprep.subr.bf16.mxu0 %v2162
        %2659 = vmatpush1.bf16.msra.mxu0 %v2161
        %2660 = vmatprep.subr.bf16.mxu0 %v2158
        %2661 = vmatpush1.bf16.msra.mxu0 %v2157
        %2662 = vmatprep.subr.bf16.mxu0 %v2218
        %2663 = vmatpush2.bf16.msra.mxu0 %v2217
        %2664 = vmatprep.subr.bf16.mxu0 %v2214
        %2665 = vmatpush2.bf16.msra.mxu0 %v2213
        %2666 = vmatprep.subr.bf16.mxu0 %v2210
        %2667 = vmatpush2.bf16.msra.mxu0 %v2209
        %2668 = vmatprep.subr.bf16.mxu0 %v2206
        %2669 = vmatpush2.bf16.msra.mxu0 %v2205
        %2670 = vmatprep.subr.bf16.mxu0 %v2202
        %2671 = vmatpush2.bf16.msra.mxu0 %v2201
        %2672 = vmatprep.subr.bf16.mxu0 %v2198
        %2673 = vmatpush2.bf16.msra.mxu0 %v2197
        %2674 = vmatprep.subr.bf16.mxu0 %v2194
        %2675 = vmatpush2.bf16.msra.mxu0 %v2193
        %2676 = vmatprep.subr.bf16.mxu0 %v2190
        %2677 = vmatpush2.bf16.msra.mxu0 %v2189
        %2678 = vmatprep.mubr.bf16.mxu0 %v1026
        %2679 = vmatmul.mubr.bf16.gmra.mxu0 %v1025
        %v2680 = vpop.f32.mrf.mxu0
        %v2681 = vadd.f32 %v2640, %v2680
        %v2682 = vpop.f32.mrf.mxu0
        %v2683 = vadd.f32 %v2642, %v2682
        %v2684 = vpop.f32.mrf.mxu0
        %v2685 = vpop.f32.mrf.mxu0
        %2686 = vdwg.mxu0
        %2687 = vmatprep.subr.bf16.mxu0 %v2250
        %2688 = vmatpush1.bf16.msra.mxu0 %v2249
        %2689 = vmatprep.subr.bf16.mxu0 %v2246
        %2690 = vmatpush1.bf16.msra.mxu0 %v2245
        %2691 = vmatprep.subr.bf16.mxu0 %v2242
        %2692 = vmatpush1.bf16.msra.mxu0 %v2241
        %2693 = vmatprep.subr.bf16.mxu0 %v2238
        %2694 = vmatpush1.bf16.msra.mxu0 %v2237
        %2695 = vmatprep.subr.bf16.mxu0 %v2234
        %2696 = vmatpush1.bf16.msra.mxu0 %v2233
        %2697 = vmatprep.subr.bf16.mxu0 %v2230
        %2698 = vmatpush1.bf16.msra.mxu0 %v2229
        %2699 = vmatprep.subr.bf16.mxu0 %v2226
        %2700 = vmatpush1.bf16.msra.mxu0 %v2225
        %2701 = vmatprep.subr.bf16.mxu0 %v2222
        %2702 = vmatpush1.bf16.msra.mxu0 %v2221
        %2703 = vmatprep.subr.bf16.mxu0 %v2282
        %2704 = vmatpush2.bf16.msra.mxu0 %v2281
        %2705 = vmatprep.subr.bf16.mxu0 %v2278
        %2706 = vmatpush2.bf16.msra.mxu0 %v2277
        %2707 = vmatprep.subr.bf16.mxu0 %v2274
        %2708 = vmatpush2.bf16.msra.mxu0 %v2273
        %2709 = vmatprep.subr.bf16.mxu0 %v2270
        %2710 = vmatpush2.bf16.msra.mxu0 %v2269
        %2711 = vmatprep.subr.bf16.mxu0 %v2266
        %2712 = vmatpush2.bf16.msra.mxu0 %v2265
        %2713 = vmatprep.subr.bf16.mxu0 %v2262
        %2714 = vmatpush2.bf16.msra.mxu0 %v2261
        %2715 = vmatprep.subr.bf16.mxu0 %v2258
        %2716 = vmatpush2.bf16.msra.mxu0 %v2257
        %2717 = vmatprep.subr.bf16.mxu0 %v2254
        %2718 = vmatpush2.bf16.msra.mxu0 %v2253
        %2719 = vmatprep.mubr.bf16.mxu0 %v1028
        %2720 = vmatmul.mubr.bf16.gmra.mxu0 %v1027
        %v2721 = vpop.f32.mrf.mxu0
        %v2722 = vadd.f32 %v2681, %v2721
        %v2723 = vpop.f32.mrf.mxu0
        %v2724 = vadd.f32 %v2683, %v2723
        %v2725 = vpop.f32.mrf.mxu0
        %v2726 = vpop.f32.mrf.mxu0
        %2727 = vdwg.mxu0
        %2728 = vmatprep.subr.bf16.mxu0 %v2314
        %2729 = vmatpush1.bf16.msra.mxu0 %v2313
        %2730 = vmatprep.subr.bf16.mxu0 %v2310
        %2731 = vmatpush1.bf16.msra.mxu0 %v2309
        %2732 = vmatprep.subr.bf16.mxu0 %v2306
        %2733 = vmatpush1.bf16.msra.mxu0 %v2305
        %2734 = vmatprep.subr.bf16.mxu0 %v2302
        %2735 = vmatpush1.bf16.msra.mxu0 %v2301
        %2736 = vmatprep.subr.bf16.mxu0 %v2298
        %2737 = vmatpush1.bf16.msra.mxu0 %v2297
        %2738 = vmatprep.subr.bf16.mxu0 %v2294
        %2739 = vmatpush1.bf16.msra.mxu0 %v2293
        %2740 = vmatprep.subr.bf16.mxu0 %v2290
        %2741 = vmatpush1.bf16.msra.mxu0 %v2289
        %2742 = vmatprep.subr.bf16.mxu0 %v2286
        %2743 = vmatpush1.bf16.msra.mxu0 %v2285
        %2744 = vmatprep.subr.bf16.mxu0 %v2346
        %2745 = vmatpush2.bf16.msra.mxu0 %v2345
        %2746 = vmatprep.subr.bf16.mxu0 %v2342
        %2747 = vmatpush2.bf16.msra.mxu0 %v2341
        %2748 = vmatprep.subr.bf16.mxu0 %v2338
        %2749 = vmatpush2.bf16.msra.mxu0 %v2337
        %2750 = vmatprep.subr.bf16.mxu0 %v2334
        %2751 = vmatpush2.bf16.msra.mxu0 %v2333
        %2752 = vmatprep.subr.bf16.mxu0 %v2330
        %2753 = vmatpush2.bf16.msra.mxu0 %v2329
        %2754 = vmatprep.subr.bf16.mxu0 %v2326
        %2755 = vmatpush2.bf16.msra.mxu0 %v2325
        %2756 = vmatprep.subr.bf16.mxu0 %v2322
        %2757 = vmatpush2.bf16.msra.mxu0 %v2321
        %2758 = vmatprep.subr.bf16.mxu0 %v2318
        %2759 = vmatpush2.bf16.msra.mxu0 %v2317
        %2760 = vmatprep.mubr.bf16.mxu0 %v1030
        %2761 = vmatmul.mubr.bf16.gmra.mxu0 %v1029
        %v2762 = vpop.f32.mrf.mxu0
        %v2763 = vadd.f32 %v2722, %v2762
        %v2764 = vpop.f32.mrf.mxu0
        %v2765 = vadd.f32 %v2724, %v2764
        %v2766 = vpop.f32.mrf.mxu0
        %v2767 = vpop.f32.mrf.mxu0
        %2768 = vdwg.mxu0
        %2769 = vmatprep.subr.bf16.mxu0 %v2124
        %2770 = vmatpush1.bf16.msra.mxu0 %v2123
        %2771 = vmatprep.subr.bf16.mxu0 %v2120
        %2772 = vmatpush1.bf16.msra.mxu0 %v2119
        %2773 = vmatprep.subr.bf16.mxu0 %v2116
        %2774 = vmatpush1.bf16.msra.mxu0 %v2115
        %2775 = vmatprep.subr.bf16.mxu0 %v2112
        %2776 = vmatpush1.bf16.msra.mxu0 %v2111
        %2777 = vmatprep.subr.bf16.mxu0 %v2108
        %2778 = vmatpush1.bf16.msra.mxu0 %v2107
        %2779 = vmatprep.subr.bf16.mxu0 %v2104
        %2780 = vmatpush1.bf16.msra.mxu0 %v2103
        %2781 = vmatprep.subr.bf16.mxu0 %v2100
        %2782 = vmatpush1.bf16.msra.mxu0 %v2099
        %2783 = vmatprep.subr.bf16.mxu0 %v2096
        %2784 = vmatpush1.bf16.msra.mxu0 %v2095
        %2785 = vmatprep.subr.bf16.mxu0 %v2156
        %2786 = vmatpush2.bf16.msra.mxu0 %v2155
        %2787 = vmatprep.subr.bf16.mxu0 %v2152
        %2788 = vmatpush2.bf16.msra.mxu0 %v2151
        %2789 = vmatprep.subr.bf16.mxu0 %v2148
        %2790 = vmatpush2.bf16.msra.mxu0 %v2147
        %2791 = vmatprep.subr.bf16.mxu0 %v2144
        %2792 = vmatpush2.bf16.msra.mxu0 %v2143
        %2793 = vmatprep.subr.bf16.mxu0 %v2140
        %2794 = vmatpush2.bf16.msra.mxu0 %v2139
        %2795 = vmatprep.subr.bf16.mxu0 %v2136
        %2796 = vmatpush2.bf16.msra.mxu0 %v2135
        %2797 = vmatprep.subr.bf16.mxu0 %v2132
        %2798 = vmatpush2.bf16.msra.mxu0 %v2131
        %2799 = vmatprep.subr.bf16.mxu0 %v2128
        %2800 = vmatpush2.bf16.msra.mxu0 %v2127
        %2801 = vmatprep.mubr.bf16.mxu0 %v1024
        %2802 = vmatmul.mubr.bf16.gmra.mxu0 %v1023
        %v2803 = vpop.f32.mrf.mxu0
        %v2804 = vadd.f32 %v1320, %v2803
        %v2805 = vpop.f32.mrf.mxu0
        %v2806 = vadd.f32 %v1324, %v2805
        %v2807 = vpop.f32.mrf.mxu0
        %v2808 = vpop.f32.mrf.mxu0
        %2809 = vdwg.mxu0
        %2810 = vmatprep.subr.bf16.mxu0 %v2188
        %2811 = vmatpush1.bf16.msra.mxu0 %v2187
        %2812 = vmatprep.subr.bf16.mxu0 %v2184
        %2813 = vmatpush1.bf16.msra.mxu0 %v2183
        %2814 = vmatprep.subr.bf16.mxu0 %v2180
        %2815 = vmatpush1.bf16.msra.mxu0 %v2179
        %2816 = vmatprep.subr.bf16.mxu0 %v2176
        %2817 = vmatpush1.bf16.msra.mxu0 %v2175
        %2818 = vmatprep.subr.bf16.mxu0 %v2172
        %2819 = vmatpush1.bf16.msra.mxu0 %v2171
        %2820 = vmatprep.subr.bf16.mxu0 %v2168
        %2821 = vmatpush1.bf16.msra.mxu0 %v2167
        %2822 = vmatprep.subr.bf16.mxu0 %v2164
        %2823 = vmatpush1.bf16.msra.mxu0 %v2163
        %2824 = vmatprep.subr.bf16.mxu0 %v2160
        %2825 = vmatpush1.bf16.msra.mxu0 %v2159
        %2826 = vmatprep.subr.bf16.mxu0 %v2220
        %2827 = vmatpush2.bf16.msra.mxu0 %v2219
        %2828 = vmatprep.subr.bf16.mxu0 %v2216
        %2829 = vmatpush2.bf16.msra.mxu0 %v2215
        %2830 = vmatprep.subr.bf16.mxu0 %v2212
        %2831 = vmatpush2.bf16.msra.mxu0 %v2211
        %2832 = vmatprep.subr.bf16.mxu0 %v2208
        %2833 = vmatpush2.bf16.msra.mxu0 %v2207
        %2834 = vmatprep.subr.bf16.mxu0 %v2204
        %2835 = vmatpush2.bf16.msra.mxu0 %v2203
        %2836 = vmatprep.subr.bf16.mxu0 %v2200
        %2837 = vmatpush2.bf16.msra.mxu0 %v2199
        %2838 = vmatprep.subr.bf16.mxu0 %v2196
        %2839 = vmatpush2.bf16.msra.mxu0 %v2195
        %2840 = vmatprep.subr.bf16.mxu0 %v2192
        %2841 = vmatpush2.bf16.msra.mxu0 %v2191
        %2842 = vmatprep.mubr.bf16.mxu0 %v1026
        %2843 = vmatmul.mubr.bf16.gmra.mxu0 %v1025
        %v2844 = vpop.f32.mrf.mxu0
        %v2845 = vadd.f32 %v2804, %v2844
        %v2846 = vpop.f32.mrf.mxu0
        %v2847 = vadd.f32 %v2806, %v2846
        %v2848 = vpop.f32.mrf.mxu0
        %v2849 = vpop.f32.mrf.mxu0
        %2850 = vdwg.mxu0
        %2851 = vmatprep.subr.bf16.mxu0 %v2252
        %2852 = vmatpush1.bf16.msra.mxu0 %v2251
        %2853 = vmatprep.subr.bf16.mxu0 %v2248
        %2854 = vmatpush1.bf16.msra.mxu0 %v2247
        %2855 = vmatprep.subr.bf16.mxu0 %v2244
        %2856 = vmatpush1.bf16.msra.mxu0 %v2243
        %2857 = vmatprep.subr.bf16.mxu0 %v2240
        %2858 = vmatpush1.bf16.msra.mxu0 %v2239
        %2859 = vmatprep.subr.bf16.mxu0 %v2236
        %2860 = vmatpush1.bf16.msra.mxu0 %v2235
        %2861 = vmatprep.subr.bf16.mxu0 %v2232
        %2862 = vmatpush1.bf16.msra.mxu0 %v2231
        %2863 = vmatprep.subr.bf16.mxu0 %v2228
        %2864 = vmatpush1.bf16.msra.mxu0 %v2227
        %2865 = vmatprep.subr.bf16.mxu0 %v2224
        %2866 = vmatpush1.bf16.msra.mxu0 %v2223
        %2867 = vmatprep.subr.bf16.mxu0 %v2284
        %2868 = vmatpush2.bf16.msra.mxu0 %v2283
        %2869 = vmatprep.subr.bf16.mxu0 %v2280
        %2870 = vmatpush2.bf16.msra.mxu0 %v2279
        %2871 = vmatprep.subr.bf16.mxu0 %v2276
        %2872 = vmatpush2.bf16.msra.mxu0 %v2275
        %2873 = vmatprep.subr.bf16.mxu0 %v2272
        %2874 = vmatpush2.bf16.msra.mxu0 %v2271
        %2875 = vmatprep.subr.bf16.mxu0 %v2268
        %2876 = vmatpush2.bf16.msra.mxu0 %v2267
        %2877 = vmatprep.subr.bf16.mxu0 %v2264
        %2878 = vmatpush2.bf16.msra.mxu0 %v2263
        %2879 = vmatprep.subr.bf16.mxu0 %v2260
        %2880 = vmatpush2.bf16.msra.mxu0 %v2259
        %2881 = vmatprep.subr.bf16.mxu0 %v2256
        %2882 = vmatpush2.bf16.msra.mxu0 %v2255
        %2883 = vmatprep.mubr.bf16.mxu0 %v1028
        %2884 = vmatmul.mubr.bf16.gmra.mxu0 %v1027
        %v2885 = vpop.f32.mrf.mxu0
        %v2886 = vadd.f32 %v2845, %v2885
        %v2887 = vpop.f32.mrf.mxu0
        %v2888 = vadd.f32 %v2847, %v2887
        %v2889 = vpop.f32.mrf.mxu0
        %v2890 = vpop.f32.mrf.mxu0
        %2891 = vdwg.mxu0
        %2892 = vmatprep.subr.bf16.mxu0 %v2316
        %2893 = vmatpush1.bf16.msra.mxu0 %v2315
        %2894 = vmatprep.subr.bf16.mxu0 %v2312
        %2895 = vmatpush1.bf16.msra.mxu0 %v2311
        %2896 = vmatprep.subr.bf16.mxu0 %v2308
        %2897 = vmatpush1.bf16.msra.mxu0 %v2307
        %2898 = vmatprep.subr.bf16.mxu0 %v2304
        %2899 = vmatpush1.bf16.msra.mxu0 %v2303
        %2900 = vmatprep.subr.bf16.mxu0 %v2300
        %2901 = vmatpush1.bf16.msra.mxu0 %v2299
        %2902 = vmatprep.subr.bf16.mxu0 %v2296
        %2903 = vmatpush1.bf16.msra.mxu0 %v2295
        %2904 = vmatprep.subr.bf16.mxu0 %v2292
        %2905 = vmatpush1.bf16.msra.mxu0 %v2291
        %2906 = vmatprep.subr.bf16.mxu0 %v2288
        %2907 = vmatpush1.bf16.msra.mxu0 %v2287
        %2908 = vmatprep.subr.bf16.mxu0 %v2348
        %2909 = vmatpush2.bf16.msra.mxu0 %v2347
        %2910 = vmatprep.subr.bf16.mxu0 %v2344
        %2911 = vmatpush2.bf16.msra.mxu0 %v2343
        %2912 = vmatprep.subr.bf16.mxu0 %v2340
        %2913 = vmatpush2.bf16.msra.mxu0 %v2339
        %2914 = vmatprep.subr.bf16.mxu0 %v2336
        %2915 = vmatpush2.bf16.msra.mxu0 %v2335
        %2916 = vmatprep.subr.bf16.mxu0 %v2332
        %2917 = vmatpush2.bf16.msra.mxu0 %v2331
        %2918 = vmatprep.subr.bf16.mxu0 %v2328
        %2919 = vmatpush2.bf16.msra.mxu0 %v2327
        %2920 = vmatprep.subr.bf16.mxu0 %v2324
        %2921 = vmatpush2.bf16.msra.mxu0 %v2323
        %2922 = vmatprep.subr.bf16.mxu0 %v2320
        %2923 = vmatpush2.bf16.msra.mxu0 %v2319
        %2924 = vmatprep.mubr.bf16.mxu0 %v1030
        %2925 = vmatmul.mubr.bf16.gmra.mxu0 %v1029
        %v2926 = vpop.f32.mrf.mxu0
        %v2927 = vadd.f32 %v2886, %v2926
        %v2928 = vpop.f32.mrf.mxu0
        %v2929 = vadd.f32 %v2888, %v2928
        %v2930 = vpop.f32.mrf.mxu0
        %v2931 = vpop.f32.mrf.mxu0
        %2932 = vdwg.mxu0
        %v2933 = vadd.f32 %v2763, %v2765
        %v2934 = vadd.f32 %v2933, %v2927
        %v2935 = vadd.f32 %v2934, %v2929
        %2936 = vadd.xlane.f32.xlu0 %v2935
        %v2937 = vpop.xlane.xlu0 %2936
        %v2938 = vrcp.pop 512.0
        %v2939 = vmul.f32 %v2937, %v2938
        %v2940 = vsub.f32 %v2763, %v2939
        %v2941 = vsub.f32 %v2765, %v2939
        %v2942 = vsub.f32 %v2927, %v2939
        %v2943 = vsub.f32 %v2929, %v2939
        %v2944 = vmul.f32 %v2940, %v2940
        %v2945 = vmul.f32 %v2941, %v2941
        %v2946 = vmul.f32 %v2942, %v2942
        %v2947 = vmul.f32 %v2943, %v2943
        %v2948 = vadd.f32 %v2944, %v2945
        %v2949 = vadd.f32 %v2948, %v2946
        %v2950 = vadd.f32 %v2949, %v2947
        %2951 = vadd.xlane.f32.xlu0 %v2950
        %v2952 = vpop.xlane.xlu0 %2951
        %v2953 = vmul.f32 %v2952, %v2938
        %v2954 = vadd.f32 %v2953, 1e-05
        %v2955 = vrsqrt.pop %v2954
        %v2956 = vmul.f32 %v2940, %v2955
        %v2957 = vmul.f32 %v2941, %v2955
        %v2958 = vmul.f32 %v2942, %v2955
        %v2959 = vmul.f32 %v2943, %v2955
        %v2960 = vlaneseq
        %v2961 = vshrl.u32 %v2960, 7
        %v2962 = vsub.s32 1, %v2961
        %v2963 = vrot.slane %v369, %v2962
        %v2964 = vlaneseq
        %v2965 = vshrl.u32 %v2964, 7
        %v2966 = vsub.s32 5, %v2965
        %v2967 = vrot.slane %v369, %v2966
        %v2968 = vlaneseq
        %v2969 = vshrl.u32 %v2968, 7
        %v2970 = vsub.s32 1, %v2969
        %v2971 = vrot.slane %v370, %v2970
        %v2972 = vlaneseq
        %v2973 = vshrl.u32 %v2972, 7
        %v2974 = vsub.s32 5, %v2973
        %v2975 = vrot.slane %v370, %v2974
        %v2980 = vlaneseq
        %v2981 = vshrl.u32 %v2980, 7
        %v2982 = vsub.s32 1, %v2981
        %v2983 = vrot.slane %v2963, %v2982
        %v2984 = vlaneseq
        %v2985 = vshrl.u32 %v2984, 7
        %v2986 = vsub.s32 1, %v2985
        %v2987 = vrot.slane %v2967, %v2986
        %v2988 = vlaneseq
        %v2989 = vshrl.u32 %v2988, 7
        %v2990 = vsub.s32 1, %v2989
        %v2991 = vrot.slane %v2971, %v2990
        %v2992 = vlaneseq
        %v2993 = vshrl.u32 %v2992, 7
        %v2994 = vsub.s32 1, %v2993
        %v2995 = vrot.slane %v2975, %v2994
        %v2996 = vmul.f32 %v2956, %v2983
        %v2997 = vmul.f32 %v2957, %v2987
        %v2998 = vmul.f32 %v2958, %v2991
        %v2999 = vmul.f32 %v2959, %v2995
        %v3000 = vlaneseq
        %v3001 = vshrl.u32 %v3000, 7
        %v3002 = vsub.s32 2, %v3001
        %v3003 = vrot.slane %v369, %v3002
        %v3004 = vlaneseq
        %v3005 = vshrl.u32 %v3004, 7
        %v3006 = vsub.s32 6, %v3005
        %v3007 = vrot.slane %v369, %v3006
        %v3008 = vlaneseq
        %v3009 = vshrl.u32 %v3008, 7
        %v3010 = vsub.s32 2, %v3009
        %v3011 = vrot.slane %v370, %v3010
        %v3012 = vlaneseq
        %v3013 = vshrl.u32 %v3012, 7
        %v3014 = vsub.s32 6, %v3013
        %v3015 = vrot.slane %v370, %v3014
        %v3020 = vlaneseq
        %v3021 = vshrl.u32 %v3020, 7
        %v3022 = vsub.s32 2, %v3021
        %v3023 = vrot.slane %v3003, %v3022
        %v3024 = vlaneseq
        %v3025 = vshrl.u32 %v3024, 7
        %v3026 = vsub.s32 2, %v3025
        %v3027 = vrot.slane %v3007, %v3026
        %v3028 = vlaneseq
        %v3029 = vshrl.u32 %v3028, 7
        %v3030 = vsub.s32 2, %v3029
        %v3031 = vrot.slane %v3011, %v3030
        %v3032 = vlaneseq
        %v3033 = vshrl.u32 %v3032, 7
        %v3034 = vsub.s32 2, %v3033
        %v3035 = vrot.slane %v3015, %v3034
        %v3036 = vadd.f32 %v2996, %v3023
        %v3037 = vadd.f32 %v2997, %v3027
        %v3038 = vadd.f32 %v2998, %v3031
        %v3039 = vadd.f32 %v2999, %v3035
        %v3040 = vmax.f32 %v3036, 0.0
        %v3041 = vmax.f32 %v3037, 0.0
        %v3042 = vmax.f32 %v3038, 0.0
        %v3043 = vmax.f32 %v3039, 0.0
        %v3044 = vpack.c.bf16 %v3040, %v3040
        %v3045 = vpack.c.bf16 %v3041, %v3041
        %v3046 = vpack.c.bf16 %v3042, %v3042
        %v3047 = vpack.c.bf16 %v3043, %v3043
        %v3048 = vld [vmem:[#allocation10] sm:$0xf]
        %v3049 = vld [vmem:[#allocation10 + $0x4] sm:$0xf]
        %v3050 = vld [vmem:[#allocation10 + $0x8] sm:$0xf]
        %v3051 = vld [vmem:[#allocation10 + $0xc] sm:$0xf]
        %v3052 = vld [vmem:[#allocation10 + $0x10] sm:$0xf]
        %v3053 = vld [vmem:[#allocation10 + $0x14] sm:$0xf]
        %v3054 = vld [vmem:[#allocation10 + $0x18] sm:$0xf]
        %v3055 = vld [vmem:[#allocation10 + $0x1c] sm:$0xf]
        %v3056 = vld [vmem:[#allocation10 + $0x20] sm:$0xf]
        %v3057 = vld [vmem:[#allocation10 + $0x24] sm:$0xf]
        %v3058 = vld [vmem:[#allocation10 + $0x28] sm:$0xf]
        %v3059 = vld [vmem:[#allocation10 + $0x2c] sm:$0xf]
        %v3060 = vld [vmem:[#allocation10 + $0x30] sm:$0xf]
        %v3061 = vld [vmem:[#allocation10 + $0x34] sm:$0xf]
        %v3062 = vld [vmem:[#allocation10 + $0x38] sm:$0xf]
        %v3063 = vld [vmem:[#allocation10 + $0x3c] sm:$0xf]
        %v3064 = vld [vmem:[#allocation10 + $0x40] sm:$0xf]
        %v3065 = vld [vmem:[#allocation10 + $0x44] sm:$0xf]
        %v3066 = vld [vmem:[#allocation10 + $0x48] sm:$0xf]
        %v3067 = vld [vmem:[#allocation10 + $0x4c] sm:$0xf]
        %v3068 = vld [vmem:[#allocation10 + $0x50] sm:$0xf]
        %v3069 = vld [vmem:[#allocation10 + $0x54] sm:$0xf]
        %v3070 = vld [vmem:[#allocation10 + $0x58] sm:$0xf]
        %v3071 = vld [vmem:[#allocation10 + $0x5c] sm:$0xf]
        %v3072 = vld [vmem:[#allocation10 + $0x60] sm:$0xf]
        %v3073 = vld [vmem:[#allocation10 + $0x64] sm:$0xf]
        %v3074 = vld [vmem:[#allocation10 + $0x68] sm:$0xf]
        %v3075 = vld [vmem:[#allocation10 + $0x6c] sm:$0xf]
        %v3076 = vld [vmem:[#allocation10 + $0x70] sm:$0xf]
        %v3077 = vld [vmem:[#allocation10 + $0x74] sm:$0xf]
        %v3078 = vld [vmem:[#allocation10 + $0x78] sm:$0xf]
        %v3079 = vld [vmem:[#allocation10 + $0x7c] sm:$0xf]
        %v3080 = vld [vmem:[#allocation10 + $0x80] sm:$0xf]
        %v3081 = vld [vmem:[#allocation10 + $0x84] sm:$0xf]
        %v3082 = vld [vmem:[#allocation10 + $0x88] sm:$0xf]
        %v3083 = vld [vmem:[#allocation10 + $0x8c] sm:$0xf]
        %v3084 = vld [vmem:[#allocation10 + $0x90] sm:$0xf]
        %v3085 = vld [vmem:[#allocation10 + $0x94] sm:$0xf]
        %v3086 = vld [vmem:[#allocation10 + $0x98] sm:$0xf]
        %v3087 = vld [vmem:[#allocation10 + $0x9c] sm:$0xf]
        %v3088 = vld [vmem:[#allocation10 + $0xa0] sm:$0xf]
        %v3089 = vld [vmem:[#allocation10 + $0xa4] sm:$0xf]
        %v3090 = vld [vmem:[#allocation10 + $0xa8] sm:$0xf]
        %v3091 = vld [vmem:[#allocation10 + $0xac] sm:$0xf]
        %v3092 = vld [vmem:[#allocation10 + $0xb0] sm:$0xf]
        %v3093 = vld [vmem:[#allocation10 + $0xb4] sm:$0xf]
        %v3094 = vld [vmem:[#allocation10 + $0xb8] sm:$0xf]
        %v3095 = vld [vmem:[#allocation10 + $0xbc] sm:$0xf]
        %v3096 = vld [vmem:[#allocation10 + $0xc0] sm:$0xf]
        %v3097 = vld [vmem:[#allocation10 + $0xc4] sm:$0xf]
        %v3098 = vld [vmem:[#allocation10 + $0xc8] sm:$0xf]
        %v3099 = vld [vmem:[#allocation10 + $0xcc] sm:$0xf]
        %v3100 = vld [vmem:[#allocation10 + $0xd0] sm:$0xf]
        %v3101 = vld [vmem:[#allocation10 + $0xd4] sm:$0xf]
        %v3102 = vld [vmem:[#allocation10 + $0xd8] sm:$0xf]
        %v3103 = vld [vmem:[#allocation10 + $0xdc] sm:$0xf]
        %v3104 = vld [vmem:[#allocation10 + $0xe0] sm:$0xf]
        %v3105 = vld [vmem:[#allocation10 + $0xe4] sm:$0xf]
        %v3106 = vld [vmem:[#allocation10 + $0xe8] sm:$0xf]
        %v3107 = vld [vmem:[#allocation10 + $0xec] sm:$0xf]
        %v3108 = vld [vmem:[#allocation10 + $0xf0] sm:$0xf]
        %v3109 = vld [vmem:[#allocation10 + $0xf4] sm:$0xf]
        %v3110 = vld [vmem:[#allocation10 + $0xf8] sm:$0xf]
        %v3111 = vld [vmem:[#allocation10 + $0xfc] sm:$0xf]
        %v3112 = vld [vmem:[%s6] sm:$0x1]
        %v3114 = vlaneseq
        %v3115 = vshrl.u32 %v3114, 7
        %v3116 = vsub.s32 0, %v3115
        %v3117 = vrot.slane %v3112, %v3116
        %v3183 = vunpack.c.l.b16 %v3048
        %v3184 = vunpack.c.l.b16 %v3049
        %v3185 = vunpack.c.l.b16 %v3050
        %v3186 = vunpack.c.l.b16 %v3051
        %v3187 = vunpack.c.l.b16 %v3052
        %v3188 = vunpack.c.l.b16 %v3053
        %v3189 = vunpack.c.l.b16 %v3054
        %v3190 = vunpack.c.l.b16 %v3055
        %v3191 = vunpack.c.l.b16 %v3056
        %v3192 = vunpack.c.l.b16 %v3057
        %v3193 = vunpack.c.l.b16 %v3058
        %v3194 = vunpack.c.l.b16 %v3059
        %v3195 = vunpack.c.l.b16 %v3060
        %v3196 = vunpack.c.l.b16 %v3061
        %v3197 = vunpack.c.l.b16 %v3062
        %v3198 = vunpack.c.l.b16 %v3063
        %v3199 = vunpack.c.l.b16 %v3064
        %v3200 = vunpack.c.l.b16 %v3065
        %v3201 = vunpack.c.l.b16 %v3066
        %v3202 = vunpack.c.l.b16 %v3067
        %v3203 = vunpack.c.l.b16 %v3068
        %v3204 = vunpack.c.l.b16 %v3069
        %v3205 = vunpack.c.l.b16 %v3070
        %v3206 = vunpack.c.l.b16 %v3071
        %v3207 = vunpack.c.l.b16 %v3072
        %v3208 = vunpack.c.l.b16 %v3073
        %v3209 = vunpack.c.l.b16 %v3074
        %v3210 = vunpack.c.l.b16 %v3075
        %v3211 = vunpack.c.l.b16 %v3076
        %v3212 = vunpack.c.l.b16 %v3077
        %v3213 = vunpack.c.l.b16 %v3078
        %v3214 = vunpack.c.l.b16 %v3079
        %v3215 = vunpack.c.l.b16 %v3080
        %v3216 = vunpack.c.l.b16 %v3081
        %v3217 = vunpack.c.l.b16 %v3082
        %v3218 = vunpack.c.l.b16 %v3083
        %v3219 = vunpack.c.l.b16 %v3084
        %v3220 = vunpack.c.l.b16 %v3085
        %v3221 = vunpack.c.l.b16 %v3086
        %v3222 = vunpack.c.l.b16 %v3087
        %v3223 = vunpack.c.l.b16 %v3088
        %v3224 = vunpack.c.l.b16 %v3089
        %v3225 = vunpack.c.l.b16 %v3090
        %v3226 = vunpack.c.l.b16 %v3091
        %v3227 = vunpack.c.l.b16 %v3092
        %v3228 = vunpack.c.l.b16 %v3093
        %v3229 = vunpack.c.l.b16 %v3094
        %v3230 = vunpack.c.l.b16 %v3095
        %v3231 = vunpack.c.l.b16 %v3096
        %v3232 = vunpack.c.l.b16 %v3097
        %v3233 = vunpack.c.l.b16 %v3098
        %v3234 = vunpack.c.l.b16 %v3099
        %v3235 = vunpack.c.l.b16 %v3100
        %v3236 = vunpack.c.l.b16 %v3101
        %v3237 = vunpack.c.l.b16 %v3102
        %v3238 = vunpack.c.l.b16 %v3103
        %v3239 = vunpack.c.l.b16 %v3104
        %v3240 = vunpack.c.l.b16 %v3105
        %v3241 = vunpack.c.l.b16 %v3106
        %v3242 = vunpack.c.l.b16 %v3107
        %v3243 = vunpack.c.l.b16 %v3108
        %v3244 = vunpack.c.l.b16 %v3109
        %v3245 = vunpack.c.l.b16 %v3110
        %v3246 = vunpack.c.l.b16 %v3111
        %v3247 = vpack.c.b16 %v3184, %v3183
        %v3248 = vpack.c.b16 %v3186, %v3185
        %v3249 = vpack.c.b16 %v3188, %v3187
        %v3250 = vpack.c.b16 %v3190, %v3189
        %v3251 = vpack.c.b16 %v3192, %v3191
        %v3252 = vpack.c.b16 %v3194, %v3193
        %v3253 = vpack.c.b16 %v3196, %v3195
        %v3254 = vpack.c.b16 %v3198, %v3197
        %v3255 = vpack.c.b16 %v3200, %v3199
        %v3256 = vpack.c.b16 %v3202, %v3201
        %v3257 = vpack.c.b16 %v3204, %v3203
        %v3258 = vpack.c.b16 %v3206, %v3205
        %v3259 = vpack.c.b16 %v3208, %v3207
        %v3260 = vpack.c.b16 %v3210, %v3209
        %v3261 = vpack.c.b16 %v3212, %v3211
        %v3262 = vpack.c.b16 %v3214, %v3213
        %v3263 = vpack.c.b16 %v3216, %v3215
        %v3264 = vpack.c.b16 %v3218, %v3217
        %v3265 = vpack.c.b16 %v3220, %v3219
        %v3266 = vpack.c.b16 %v3222, %v3221
        %v3267 = vpack.c.b16 %v3224, %v3223
        %v3268 = vpack.c.b16 %v3226, %v3225
        %v3269 = vpack.c.b16 %v3228, %v3227
        %v3270 = vpack.c.b16 %v3230, %v3229
        %v3271 = vpack.c.b16 %v3232, %v3231
        %v3272 = vpack.c.b16 %v3234, %v3233
        %v3273 = vpack.c.b16 %v3236, %v3235
        %v3274 = vpack.c.b16 %v3238, %v3237
        %v3275 = vpack.c.b16 %v3240, %v3239
        %v3276 = vpack.c.b16 %v3242, %v3241
        %v3277 = vpack.c.b16 %v3244, %v3243
        %v3278 = vpack.c.b16 %v3246, %v3245
        %3311 = vmatprep.subr.bf16.mxu0 0
        %3312 = vmatpush1.bf16.msra.mxu0 %v3254
        %3313 = vmatprep.subr.bf16.mxu0 0
        %3314 = vmatpush1.bf16.msra.mxu0 %v3253
        %3315 = vmatprep.subr.bf16.mxu0 0
        %3316 = vmatpush1.bf16.msra.mxu0 %v3252
        %3317 = vmatprep.subr.bf16.mxu0 0
        %3318 = vmatpush1.bf16.msra.mxu0 %v3251
        %3319 = vmatprep.subr.bf16.mxu0 0
        %3320 = vmatpush1.bf16.msra.mxu0 %v3250
        %3321 = vmatprep.subr.bf16.mxu0 0
        %3322 = vmatpush1.bf16.msra.mxu0 %v3249
        %3323 = vmatprep.subr.bf16.mxu0 0
        %3324 = vmatpush1.bf16.msra.mxu0 %v3248
        %3325 = vmatprep.subr.bf16.mxu0 0
        %3326 = vmatpush1.bf16.msra.mxu0 %v3247
        %3327 = vmatprep.subr.bf16.mxu0 0
        %3328 = vmatpush2.bf16.msra.mxu0 %v3262
        %3329 = vmatprep.subr.bf16.mxu0 0
        %3330 = vmatpush2.bf16.msra.mxu0 %v3261
        %3331 = vmatprep.subr.bf16.mxu0 0
        %3332 = vmatpush2.bf16.msra.mxu0 %v3260
        %3333 = vmatprep.subr.bf16.mxu0 0
        %3334 = vmatpush2.bf16.msra.mxu0 %v3259
        %3335 = vmatprep.subr.bf16.mxu0 0
        %3336 = vmatpush2.bf16.msra.mxu0 %v3258
        %3337 = vmatprep.subr.bf16.mxu0 0
        %3338 = vmatpush2.bf16.msra.mxu0 %v3257
        %3339 = vmatprep.subr.bf16.mxu0 0
        %3340 = vmatpush2.bf16.msra.mxu0 %v3256
        %3341 = vmatprep.subr.bf16.mxu0 0
        %3342 = vmatpush2.bf16.msra.mxu0 %v3255
        %3343 = vmatprep.mubr.bf16.mxu0 %v3045
        %3344 = vmatmul.mubr.bf16.gmra.mxu0 %v3044
        %v3345 = vpop.f32.mrf.mxu0
        %v3346 = vadd.f32 %v3117, %v3345
        %v3347 = vpop.f32.mrf.mxu0
        %v3348 = vpop.f32.mrf.mxu0
        %v3349 = vpop.f32.mrf.mxu0
        %3350 = vdwg.mxu0
        %3351 = vmatprep.subr.bf16.mxu0 0
        %3352 = vmatpush1.bf16.msra.mxu0 %v3270
        %3353 = vmatprep.subr.bf16.mxu0 0
        %3354 = vmatpush1.bf16.msra.mxu0 %v3269
        %3355 = vmatprep.subr.bf16.mxu0 0
        %3356 = vmatpush1.bf16.msra.mxu0 %v3268
        %3357 = vmatprep.subr.bf16.mxu0 0
        %3358 = vmatpush1.bf16.msra.mxu0 %v3267
        %3359 = vmatprep.subr.bf16.mxu0 0
        %3360 = vmatpush1.bf16.msra.mxu0 %v3266
        %3361 = vmatprep.subr.bf16.mxu0 0
        %3362 = vmatpush1.bf16.msra.mxu0 %v3265
        %3363 = vmatprep.subr.bf16.mxu0 0
        %3364 = vmatpush1.bf16.msra.mxu0 %v3264
        %3365 = vmatprep.subr.bf16.mxu0 0
        %3366 = vmatpush1.bf16.msra.mxu0 %v3263
        %3367 = vmatprep.subr.bf16.mxu0 0
        %3368 = vmatpush2.bf16.msra.mxu0 %v3278
        %3369 = vmatprep.subr.bf16.mxu0 0
        %3370 = vmatpush2.bf16.msra.mxu0 %v3277
        %3371 = vmatprep.subr.bf16.mxu0 0
        %3372 = vmatpush2.bf16.msra.mxu0 %v3276
        %3373 = vmatprep.subr.bf16.mxu0 0
        %3374 = vmatpush2.bf16.msra.mxu0 %v3275
        %3375 = vmatprep.subr.bf16.mxu0 0
        %3376 = vmatpush2.bf16.msra.mxu0 %v3274
        %3377 = vmatprep.subr.bf16.mxu0 0
        %3378 = vmatpush2.bf16.msra.mxu0 %v3273
        %3379 = vmatprep.subr.bf16.mxu0 0
        %3380 = vmatpush2.bf16.msra.mxu0 %v3272
        %3381 = vmatprep.subr.bf16.mxu0 0
        %3382 = vmatpush2.bf16.msra.mxu0 %v3271
        %3383 = vmatprep.mubr.bf16.mxu0 %v3047
        %3384 = vmatmul.mubr.bf16.gmra.mxu0 %v3046
        %v3385 = vpop.f32.mrf.mxu0
        %v3386 = vadd.f32 %v3346, %v3385
        %v3387 = vpop.f32.mrf.mxu0
        %v3388 = vpop.f32.mrf.mxu0
        %v3389 = vpop.f32.mrf.mxu0
        %3390 = vdwg.mxu0
        %3391 = vst [vmem:[%s362] sm:$0xff] %v3386
        %p3392 = scmp.lt.s32.totalorder %s24, 1
        %s3393 = scalar_select %p3392, %s24, 1
        %s3394 = smul.addr %s3393, 8
        %s3395 = scalar_lea.vmem %s7, %s3394
        // Predicated region
        $region73: #{dueling_dqn_forward.1} parent=47 // pred_check
          %p3396 = pneg %p194
        $region74: #{dueling_dqn_forward.1} parent=47 // pred_check_branch
          %3398 = sbr.rel (%p3396) target = $region76
        $region75: #{dueling_dqn_forward.1} parent=47 // pred_region
          _
        $region76: #{dueling_dqn_forward.1} parent=47 // pred_fallthru
          _
      $region48: #{dueling_dqn_forward.1} parent=5 // pred_fallthru
        _
      %p3399 = scmp.le.s32.totalorder 2, %s19
      // Predicated region
      $region77: #{dueling_dqn_forward.1} parent=5 // pred_check
        %p3400 = pneg %p3399
      $region78: #{dueling_dqn_forward.1} parent=5 // pred_check_branch
        %3402 = sbr.rel (%p3400) target = $region80
      $region79: #{dueling_dqn_forward.1} parent=5 // pred_region
        %s3403 = ssub.s32 %s19, 2
        // Predicated region
        $region81: #{dueling_dqn_forward.1} parent=79 // pred_check
          %p3404 = pneg %p200
        $region82: #{dueling_dqn_forward.1} parent=79 // pred_check_branch
          %3406 = sbr.rel (%p3404) target = $region84
        $region83: #{dueling_dqn_forward.1} parent=79 // pred_region
          %p3407 = scmp.lt.s32.totalorder %s25, 1
          %s3408 = scalar_select %p3407, %s25, 1
          %s3409 = smul.addr %s3408, 8
          %s3410 = scalar_lea.vmem %s7, %s3409
        $region84: #{dueling_dqn_forward.1} parent=79 // pred_fallthru
          _
      $region80: #{dueling_dqn_forward.1} parent=5 // pred_fallthru
        _
    $region6: #{dueling_dqn_forward.1} parent=1 // loop_footer
      %s23 = sadd.s32 1, %s19
    $region7: #{dueling_dqn_forward.1} parent=1 // loop_footer_branch
      %18 = sbr.rel target = $region3
    $region8: #{dueling_dqn_forward.1} parent=1 // loop_exit
      _
    %3411 = vsyncpa [#allocation3], 1
    %s3412 = scalar_lea.sflag [#allocation3], 1
    %3413 = vsyncpa %s3412, 1
    %3414 = vsyncpa [#allocation5], 1
    %3415 = vsyncpa [#allocation8], 1
    %3416 = vsyncpa [#allocation11], 1

</llo_original>
